<compile_context>
chip_gen: v5e
topology: v5e:2x2
jax: 0.10.0
libtpu: 0.0.40
codegen_flags: <defaults>
</compile_context>

<pallas_src>
import jax
import jax.numpy as jnp
from jax.experimental import pallas as pl
from jax.experimental.pallas import tpu as pltpu


def _round_up(x, m):
    return (x + m - 1) // m * m


def _make_head_kernel(num_inputs):
    def kernel(*refs):
        x_refs = refs[:num_inputs]
        w1_ref, b1_ref, w2_ref, b2_ref, wh_ref, bh_ref, out_ref = refs[num_inputs:]

        w1 = w1_ref[...]                                     # (Din, F) bf16

        # ---- fc1: P back-to-back MXU matmuls + running f32 max --------------
        # No in-kernel concatenate: avoids a (P*TM, Din) VMEM copy and keeps the
        # f32 intermediate at (TM, F).  The f32->bf16 cast happens here, in VMEM,
        # so the activations only cross HBM once (as f32).
        h = None
        for i in range(num_inputs):
            xi = x_refs[i][...].astype(jnp.bfloat16)
            hi = jnp.dot(xi, w1, preferred_element_type=jnp.float32)
            h = hi if h is None else jnp.maximum(h, hi)
        # Shared fc1 bias + ReLU once, after the max (bias shared across inputs,
        # ReLU monotone -> exact).
        h = jnp.maximum(h + b1_ref[...], 0.0)                # (TM, F) f32

        # ---- fc2 (eval-mode BN scale pre-folded into w2) ---------------------
        h2 = jnp.dot(h.astype(jnp.bfloat16), w2_ref[...],
                     preferred_element_type=jnp.float32)
        h2 = jnp.maximum(h2 + b2_ref[...], 0.0)

        # ---- fused heads (loc | cls | box_std), lane-padded to 128 -----------
        # Kept in f32 (tiny weight) so the 1e-4-scale box_std head keeps precision.
        out_ref[...] = (jnp.dot(h2, wh_ref[...], preferred_element_type=jnp.float32)
                        + bh_ref[...])

    return kernel


def prepare_kernel_params(raw, *, eps=1e-5):
    """Fold eval-mode BN into conv weights, pad output channels to 128 lanes, and
    fuse the three head convs into one lane-dense weight."""
    w1, w2 = raw["w1"], raw["w2"]                      # (Din, F), (F, F)
    din, f = w1.shape
    num_classes = raw["w_cls"].shape[1]

    # eval-mode BatchNorm -> per-channel scale/bias; scale folded into the weight.
    s1 = raw["bn1_gamma"] / jnp.sqrt(raw["bn1_var"] + eps)
    b1 = raw["bn1_beta"] - raw["bn1_mean"] * s1
    s2 = raw["bn2_gamma"] / jnp.sqrt(raw["bn2_var"] + eps)
    b2 = raw["bn2_beta"] - raw["bn2_mean"] * s2
    w1 = w1 * s1[None, :]
    w2 = w2 * s2[None, :]

    # Fuse the three heads: [loc | cls | box_std].
    w_head = jnp.concatenate([raw["w_loc"], raw["w_cls"], raw["w_std"]], axis=1)
    b_head = jnp.concatenate([raw["b_loc"], raw["b_cls"], raw["b_std"]], axis=0)
    hout = w_head.shape[1]

    f_pad = _round_up(f, 128)
    hout_pad = _round_up(hout, 128)

    # Zero-padding of output channels is exact: padded F columns stay 0 through
    # bias/ReLU and contribute 0 downstream; padded head columns are sliced away.
    # Din (the contraction dim) is NOT padded: x / w1 use full-extent blocks.
    w1 = jnp.pad(w1, ((0, 0), (0, f_pad - f)))
    w2 = jnp.pad(w2, ((0, f_pad - f), (0, f_pad - f)))
    w_head = jnp.pad(w_head, ((0, f_pad - f), (0, hout_pad - hout)))
    b1 = jnp.pad(b1, (0, f_pad - f))[None, :]
    b2 = jnp.pad(b2, (0, f_pad - f))[None, :]
    b_head = jnp.pad(b_head, (0, hout_pad - hout))[None, :]

    return dict(
        w1=w1.astype(jnp.bfloat16), b1=b1.astype(jnp.float32),
        w2=w2.astype(jnp.bfloat16), b2=b2.astype(jnp.float32),
        w_head=w_head.astype(jnp.float32), b_head=b_head.astype(jnp.float32),
        num_classes=num_classes,
    )


def _pick_row_tile(n, fits_vmem):
    """Largest VMEM-friendly row tile.  Block rows never exceed N (so the tiling
    rule is met by 8-divisibility or full-extent), and we only grow past 128 when
    >=2 grid steps remain so v7x's two TensorCores both get work."""
    if n < 8:
        return n                                    # full row extent (allowed)
    cap = (n // 8) * 8                              # block rows never exceed N
    tm = min(128, cap)
    for cand in (256, 512):
        if cand <= cap and n >= 2 * cand and fits_vmem(cand):
            tm = cand
    return tm


def softer_box_2fc_head(ps, kparams):
    """ps: list of NCHW arrays (N, C, H, W), f32. kparams: prepare_kernel_params
    output. Returns (loc, cls, log_var) of shapes (N, 4), (N, num_classes), (N, 4)."""
    num_inputs = len(ps)
    n = ps[0].shape[0]
    din, f_pad = kparams["w1"].shape
    hout_pad = kparams["w_head"].shape[1]
    num_classes = kparams["num_classes"]

    # Activations: reshape only (layout no-op) -- no wrapper-side cast or pad.
    xs = [p.reshape(n, -1) for p in ps]
    assert xs[0].shape[1] == din

    # ---- VMEM accounting, generation-aware limits -----------------------------
    w_bytes = (din * f_pad * 2 + f_pad * 4             # w1 (bf16) + b1 (f32)
               + f_pad * f_pad * 2 + f_pad * 4         # w2 (bf16) + b2
               + f_pad * hout_pad * 4 + hout_pad * 4)  # w_head (f32) + b_head

    try:
        vmem_cap = int(getattr(pltpu.get_tpu_info(), "vmem_capacity_bytes", 64 << 20))
    except Exception:
        vmem_cap = 64 << 20                            # conservative (v7x per-core)
    budget = vmem_cap - (8 << 20)                      # headroom for compiler scratch

    def tile_bytes(tm):
        x_t = 2 * num_inputs * tm * din * 4            # double-buffered f32 row tiles
        o_t = 2 * tm * hout_pad * 4                    # double-buffered output tiles
        live = 2 * tm * din * 2 + 3 * tm * f_pad * 4   # bf16 cast + f32 intermediates
        return x_t + o_t + live

    tm = _pick_row_tile(n, lambda t: w_bytes + tile_bytes(t) <= budget)
    grid = (pl.cdiv(n, tm),)
    # TODO(synk): if w_bytes + tile_bytes(128) still exceeds the VMEM budget (very
    # large Din * P on v7x), add a K-tiled grid axis over Din with per-input
    # partial-sum scratch instead of shrinking TM further.

    need = w_bytes + tile_bytes(tm)
    vmem_limit = int(min(max(int(1.25 * need) + (4 << 20), 32 << 20),
                         vmem_cap - (2 << 20)))

    x_spec = pl.BlockSpec((tm, din), lambda i: (i, 0))
    out_spec = pl.BlockSpec((tm, hout_pad), lambda i: (i, 0))

    flops = (2 * num_inputs * n * din * f_pad
             + 2 * n * f_pad * f_pad
             + 2 * n * f_pad * hout_pad)
    bytes_accessed = num_inputs * n * din * 4 + w_bytes + n * hout_pad * 4
    cost = pl.CostEstimate(flops=flops, transcendentals=0,
                           bytes_accessed=bytes_accessed)

    def build(single_buffer_weights):
        if single_buffer_weights:
            # Weights are grid-invariant: one VMEM buffer each (saves ~half the
            # weight VMEM vs. default double-buffering; matters most on v7x 64 MiB).
            resident = lambda shape: pl.BlockSpec(shape, lambda i: (0, 0),
                                                  pipeline_mode=pl.Buffered(1))
        else:
            resident = lambda shape: pl.BlockSpec(shape, lambda i: (0, 0))
        in_specs = [x_spec] * num_inputs + [
            resident((din, f_pad)), resident((1, f_pad)),
            resident((f_pad, f_pad)), resident((1, f_pad)),
            resident((f_pad, hout_pad)), resident((1, hout_pad)),
        ]
        return pl.pallas_call(
            _make_head_kernel(num_inputs),
            grid=grid,
            in_specs=in_specs,
            out_specs=out_spec,
            out_shape=jax.ShapeDtypeStruct((n, hout_pad), jnp.float32),
            compiler_params=pltpu.CompilerParams(
                dimension_semantics=("parallel",),
                vmem_limit_bytes=vmem_limit),
            cost_estimate=cost,
        )

    args = (*xs,
            kparams["w1"], kparams["b1"],
            kparams["w2"], kparams["b2"],
            kparams["w_head"], kparams["b_head"])
    try:
        out = build(True)(*args)
    except Exception:
        # Fallback if this Pallas build rejects pl.Buffered(1) on pallas_call input
        # specs: default double-buffering (same math, just more weight VMEM).
        out = build(False)(*args)

    loc = out[:, :4]
    cls = out[:, 4:4 + num_classes]
    log_var = out[:, 4 + num_classes:8 + num_classes]
    # NOTE: torch's bare `.squeeze()` would also drop the batch dim when N == 1
    # (or the class dim when num_classes == 1); we keep the (N, C_out) 2-D contract.
    return loc, cls, log_var


def make_params(key, in_channels, f_channels, num_classes):
    """Raw torch-equivalent parameters (conv weights as (D_in, D_out), BN stats, heads)."""
    ks = jax.random.split(key, 13)
    f32 = jnp.float32

    w1 = jax.random.normal(ks[0], (in_channels, f_channels), f32) / jnp.sqrt(in_channels)
    w2 = jax.random.normal(ks[1], (f_channels, f_channels), f32) / jnp.sqrt(f_channels)

    bn1_gamma = 1.0 + 0.1 * jax.random.normal(ks[2], (f_channels,), f32)
    bn1_beta = 0.1 * jax.random.normal(ks[3], (f_channels,), f32)
    bn1_mean = 0.1 * jax.random.normal(ks[4], (f_channels,), f32)
    bn1_var = jnp.abs(jax.random.normal(ks[5], (f_channels,), f32)) + 0.5

    bn2_gamma = 1.0 + 0.1 * jax.random.normal(ks[6], (f_channels,), f32)
    bn2_beta = 0.1 * jax.random.normal(ks[7], (f_channels,), f32)
    bn2_mean = 0.1 * jax.random.normal(ks[8], (f_channels,), f32)
    bn2_var = jnp.abs(jax.random.normal(ks[9], (f_channels,), f32)) + 0.5

    # weight_init_normal std: loc 0.001, cls 0.01, box_std 0.0001; biases zero.
    w_loc = 0.001 * jax.random.normal(ks[10], (f_channels, 4), f32)
    w_cls = 0.01 * jax.random.normal(ks[11], (f_channels, num_classes), f32)
    w_std = 0.0001 * jax.random.normal(ks[12], (f_channels, 4), f32)

    return dict(
        w1=w1, w2=w2,
        bn1_gamma=bn1_gamma, bn1_beta=bn1_beta, bn1_mean=bn1_mean, bn1_var=bn1_var,
        bn2_gamma=bn2_gamma, bn2_beta=bn2_beta, bn2_mean=bn2_mean, bn2_var=bn2_var,
        w_loc=w_loc, b_loc=jnp.zeros((4,), f32),
        w_cls=w_cls, b_cls=jnp.zeros((num_classes,), f32),
        w_std=w_std, b_std=jnp.zeros((4,), f32),
    )


if __name__ == "__main__":
    key = jax.random.PRNGKey(0)
    k_p1, k_p2, k_params = jax.random.split(key, 3)

    # Small shapes: N(=batch*num_rois)=2, C=4, H=W=16 -> in_channels = 4*16*16 = 1024
    N, C, H, W = 2, 4, 16, 16
    f_channels = 32
    num_classes = 8
    in_channels = C * H * W

    p1 = jax.random.normal(k_p1, (N, C, H, W), jnp.float32)
    p2 = jax.random.normal(k_p2, (N, C, H, W), jnp.float32)

    raw_params = make_params(k_params, in_channels, f_channels, num_classes)
    kparams = prepare_kernel_params(raw_params)

    loc_p, cls_p, log_var_p = softer_box_2fc_head([p1, p2], kparams)
    jax.block_until_ready((loc_p, cls_p, log_var_p))

    assert loc_p.shape == (N, 4)
    assert cls_p.shape == (N, num_classes)
    assert log_var_p.shape == (N, 4)
    print("KERNEL_OK")
</pallas_src>

<mosaic_0001>
module attributes {stable_mosaic.version = 11 : i64} {
  func.func @kernel(%arg0: i32, %arg1: memref<2x1024xf32, #tpu.memory_space<vmem>>, %arg2: memref<2x1024xf32, #tpu.memory_space<vmem>>, %arg3: memref<1024x128xbf16, #tpu.memory_space<vmem>>, %arg4: memref<1x128xf32, #tpu.memory_space<vmem>>, %arg5: memref<128x128xbf16, #tpu.memory_space<vmem>>, %arg6: memref<1x128xf32, #tpu.memory_space<vmem>>, %arg7: memref<128x128xf32, #tpu.memory_space<vmem>>, %arg8: memref<1x128xf32, #tpu.memory_space<vmem>>, %arg9: memref<2x128xf32, #tpu.memory_space<vmem>>) attributes {dimension_semantics = [#tpu.dimension_semantics<parallel>], iteration_bounds = array<i64: 1>, scalar_prefetch = 0 : i64, scratch_operands = 0 : i64, tpu.core_type = #tpu.core_type<tc>, window_params = [{transform_indices = @transform_0, window_bounds = array<i64: 2, 1024>}, {transform_indices = @transform_1, window_bounds = array<i64: 2, 1024>}, {pipeline_mode = #tpu.pipeline_mode<synchronous>, transform_indices = @transform_2, window_bounds = array<i64: 1024, 128>}, {pipeline_mode = #tpu.pipeline_mode<synchronous>, transform_indices = @transform_3, window_bounds = array<i64: 1, 128>}, {pipeline_mode = #tpu.pipeline_mode<synchronous>, transform_indices = @transform_4, window_bounds = array<i64: 128, 128>}, {pipeline_mode = #tpu.pipeline_mode<synchronous>, transform_indices = @transform_5, window_bounds = array<i64: 1, 128>}, {pipeline_mode = #tpu.pipeline_mode<synchronous>, transform_indices = @transform_6, window_bounds = array<i64: 128, 128>}, {pipeline_mode = #tpu.pipeline_mode<synchronous>, transform_indices = @transform_7, window_bounds = array<i64: 1, 128>}, {transform_indices = @transform_8, window_bounds = array<i64: 2, 128>}]} {
    %c0 = arith.constant 0 : index
    %c0_0 = arith.constant 0 : index
    %0 = vector.load %arg3[%c0, %c0_0] : memref<1024x128xbf16, #tpu.memory_space<vmem>>, vector<1024x128xbf16>
    %c0_1 = arith.constant 0 : index
    %c0_2 = arith.constant 0 : index
    %1 = vector.load %arg1[%c0_1, %c0_2] : memref<2x1024xf32, #tpu.memory_space<vmem>>, vector<2x1024xf32>
    %2 = arith.truncf %1 : vector<2x1024xf32> to vector<2x1024xbf16>
    %cst = arith.constant dense<0.000000e+00> : vector<2x128xf32>
    %3 = tpu.matmul %2, %0, %cst {dimension_numbers = #tpu.dot_dimension_numbers<[1], [0], [0], [1], [0, 0, 1, 1], [], []>} : vector<2x1024xbf16>, vector<1024x128xbf16>, vector<2x128xf32> -> vector<2x128xf32>
    %c0_3 = arith.constant 0 : index
    %c0_4 = arith.constant 0 : index
    %4 = vector.load %arg2[%c0_3, %c0_4] : memref<2x1024xf32, #tpu.memory_space<vmem>>, vector<2x1024xf32>
    %5 = arith.truncf %4 : vector<2x1024xf32> to vector<2x1024xbf16>
    %cst_5 = arith.constant dense<0.000000e+00> : vector<2x128xf32>
    %6 = tpu.matmul %5, %0, %cst_5 {dimension_numbers = #tpu.dot_dimension_numbers<[1], [0], [0], [1], [0, 0, 1, 1], [], []>} : vector<2x1024xbf16>, vector<1024x128xbf16>, vector<2x128xf32> -> vector<2x128xf32>
    %7 = arith.maximumf %3, %6 : vector<2x128xf32>
    %c0_6 = arith.constant 0 : index
    %c0_7 = arith.constant 0 : index
    %8 = vector.load %arg4[%c0_6, %c0_7] : memref<1x128xf32, #tpu.memory_space<vmem>>, vector<1x128xf32>
    %9 = vector.broadcast %8 : vector<1x128xf32> to vector<2x128xf32>
    %10 = arith.addf %7, %9 : vector<2x128xf32>
    %cst_8 = arith.constant 0.000000e+00 : f32
    %11 = vector.broadcast %cst_8 : f32 to vector<2x128xf32>
    %12 = arith.maximumf %10, %11 : vector<2x128xf32>
    %13 = arith.truncf %12 : vector<2x128xf32> to vector<2x128xbf16>
    %c0_9 = arith.constant 0 : index
    %c0_10 = arith.constant 0 : index
    %14 = vector.load %arg5[%c0_9, %c0_10] : memref<128x128xbf16, #tpu.memory_space<vmem>>, vector<128x128xbf16>
    %cst_11 = arith.constant dense<0.000000e+00> : vector<2x128xf32>
    %15 = tpu.matmul %13, %14, %cst_11 {dimension_numbers = #tpu.dot_dimension_numbers<[1], [0], [0], [1], [0, 0, 1, 1], [], []>} : vector<2x128xbf16>, vector<128x128xbf16>, vector<2x128xf32> -> vector<2x128xf32>
    %c0_12 = arith.constant 0 : index
    %c0_13 = arith.constant 0 : index
    %16 = vector.load %arg6[%c0_12, %c0_13] : memref<1x128xf32, #tpu.memory_space<vmem>>, vector<1x128xf32>
    %17 = vector.broadcast %16 : vector<1x128xf32> to vector<2x128xf32>
    %18 = arith.addf %15, %17 : vector<2x128xf32>
    %cst_14 = arith.constant 0.000000e+00 : f32
    %19 = vector.broadcast %cst_14 : f32 to vector<2x128xf32>
    %20 = arith.maximumf %18, %19 : vector<2x128xf32>
    %c0_15 = arith.constant 0 : index
    %c0_16 = arith.constant 0 : index
    %21 = vector.load %arg7[%c0_15, %c0_16] : memref<128x128xf32, #tpu.memory_space<vmem>>, vector<128x128xf32>
    %cst_17 = arith.constant dense<0.000000e+00> : vector<2x128xf32>
    %22 = tpu.matmul %20, %21, %cst_17 {dimension_numbers = #tpu.dot_dimension_numbers<[1], [0], [0], [1], [0, 0, 1, 1], [], []>} : vector<2x128xf32>, vector<128x128xf32>, vector<2x128xf32> -> vector<2x128xf32>
    %c0_18 = arith.constant 0 : index
    %c0_19 = arith.constant 0 : index
    %23 = vector.load %arg8[%c0_18, %c0_19] : memref<1x128xf32, #tpu.memory_space<vmem>>, vector<1x128xf32>
    %24 = vector.broadcast %23 : vector<1x128xf32> to vector<2x128xf32>
    %25 = arith.addf %22, %24 : vector<2x128xf32>
    %c0_20 = arith.constant 0 : index
    %c0_21 = arith.constant 0 : index
    %26 = vector.load %arg9[%c0_20, %c0_21] : memref<2x128xf32, #tpu.memory_space<vmem>>, vector<2x128xf32>
    tpu.vector_store %arg9[%c0_20, %c0_21], %25 {strides = array<i32>} : memref<2x128xf32, #tpu.memory_space<vmem>>, vector<2x128xf32>,
    return
  }
  func.func @transform_0(%arg0: i32) -> (i32, i32) {
    %c0_i32 = arith.constant 0 : i32
    %c0_i32_0 = arith.constant 0 : i32
    return %arg0, %c0_i32 : i32, i32
  }
  func.func @transform_1(%arg0: i32) -> (i32, i32) {
    %c0_i32 = arith.constant 0 : i32
    %c0_i32_0 = arith.constant 0 : i32
    return %arg0, %c0_i32 : i32, i32
  }
  func.func @transform_2(%arg0: i32) -> (i32, i32) {
    %c0_i32 = arith.constant 0 : i32
    %c0_i32_0 = arith.constant 0 : i32
    %c0_i32_1 = arith.constant 0 : i32
    return %c0_i32, %c0_i32_0 : i32, i32
  }
  func.func @transform_3(%arg0: i32) -> (i32, i32) {
    %c0_i32 = arith.constant 0 : i32
    %c0_i32_0 = arith.constant 0 : i32
    %c0_i32_1 = arith.constant 0 : i32
    return %c0_i32, %c0_i32_0 : i32, i32
  }
  func.func @transform_4(%arg0: i32) -> (i32, i32) {
    %c0_i32 = arith.constant 0 : i32
    %c0_i32_0 = arith.constant 0 : i32
    %c0_i32_1 = arith.constant 0 : i32
    return %c0_i32, %c0_i32_0 : i32, i32
  }
  func.func @transform_5(%arg0: i32) -> (i32, i32) {
    %c0_i32 = arith.constant 0 : i32
    %c0_i32_0 = arith.constant 0 : i32
    %c0_i32_1 = arith.constant 0 : i32
    return %c0_i32, %c0_i32_0 : i32, i32
  }
  func.func @transform_6(%arg0: i32) -> (i32, i32) {
    %c0_i32 = arith.constant 0 : i32
    %c0_i32_0 = arith.constant 0 : i32
    %c0_i32_1 = arith.constant 0 : i32
    return %c0_i32, %c0_i32_0 : i32, i32
  }
  func.func @transform_7(%arg0: i32) -> (i32, i32) {
    %c0_i32 = arith.constant 0 : i32
    %c0_i32_0 = arith.constant 0 : i32
    %c0_i32_1 = arith.constant 0 : i32
    return %c0_i32, %c0_i32_0 : i32, i32
  }
  func.func @transform_8(%arg0: i32) -> (i32, i32) {
    %c0_i32 = arith.constant 0 : i32
    %c0_i32_0 = arith.constant 0 : i32
    return %arg0, %c0_i32 : i32, i32
  }
}

module attributes {stable_mosaic.version = 11 : i64} {
  func.func @kernel(%arg0: i32, %arg1: memref<2x1024xf32, #tpu.memory_space<vmem>>, %arg2: memref<2x1024xf32, #tpu.memory_space<vmem>>, %arg3: memref<1024x128xbf16, #tpu.memory_space<vmem>>, %arg4: memref<1x128xf32, #tpu.memory_space<vmem>>, %arg5: memref<128x128xbf16, #tpu.memory_space<vmem>>, %arg6: memref<1x128xf32, #tpu.memory_space<vmem>>, %arg7: memref<128x128xf32, #tpu.memory_space<vmem>>, %arg8: memref<1x128xf32, #tpu.memory_space<vmem>>, %arg9: memref<2x128xf32, #tpu.memory_space<vmem>>) attributes {dimension_semantics = [#tpu.dimension_semantics<parallel>], iteration_bounds = array<i64: 1>, scalar_prefetch = 0 : i64, scratch_operands = 0 : i64, tpu.core_type = #tpu.core_type<tc>, window_params = [{transform_indices = @transform_0, window_bounds = array<i64: 2, 1024>}, {transform_indices = @transform_1, window_bounds = array<i64: 2, 1024>}, {pipeline_mode = #tpu.pipeline_mode<synchronous>, transform_indices = @transform_2, window_bounds = array<i64: 1024, 128>}, {pipeline_mode = #tpu.pipeline_mode<synchronous>, transform_indices = @transform_3, window_bounds = array<i64: 1, 128>}, {pipeline_mode = #tpu.pipeline_mode<synchronous>, transform_indices = @transform_4, window_bounds = array<i64: 128, 128>}, {pipeline_mode = #tpu.pipeline_mode<synchronous>, transform_indices = @transform_5, window_bounds = array<i64: 1, 128>}, {pipeline_mode = #tpu.pipeline_mode<synchronous>, transform_indices = @transform_6, window_bounds = array<i64: 128, 128>}, {pipeline_mode = #tpu.pipeline_mode<synchronous>, transform_indices = @transform_7, window_bounds = array<i64: 1, 128>}, {transform_indices = @transform_8, window_bounds = array<i64: 2, 128>}]} {
    %c0 = arith.constant 0 : index
    %c0_0 = arith.constant 0 : index
    %0 = vector.load %arg3[%c0, %c0_0] : memref<1024x128xbf16, #tpu.memory_space<vmem>>, vector<1024x128xbf16>
    %c0_1 = arith.constant 0 : index
    %c0_2 = arith.constant 0 : index
    %1 = vector.load %arg1[%c0_1, %c0_2] : memref<2x1024xf32, #tpu.memory_space<vmem>>, vector<2x1024xf32>
    %2 = arith.truncf %1 : vector<2x1024xf32> to vector<2x1024xbf16>
    %cst = arith.constant dense<0.000000e+00> : vector<2x128xf32>
    %3 = tpu.matmul %2, %0, %cst {dimension_numbers = #tpu.dot_dimension_numbers<[1], [0], [0], [1], [0, 0, 1, 1], [], []>} : vector<2x1024xbf16>, vector<1024x128xbf16>, vector<2x128xf32> -> vector<2x128xf32>
    %c0_3 = arith.constant 0 : index
    %c0_4 = arith.constant 0 : index
    %4 = vector.load %arg2[%c0_3, %c0_4] : memref<2x1024xf32, #tpu.memory_space<vmem>>, vector<2x1024xf32>
    %5 = arith.truncf %4 : vector<2x1024xf32> to vector<2x1024xbf16>
    %cst_5 = arith.constant dense<0.000000e+00> : vector<2x128xf32>
    %6 = tpu.matmul %5, %0, %cst_5 {dimension_numbers = #tpu.dot_dimension_numbers<[1], [0], [0], [1], [0, 0, 1, 1], [], []>} : vector<2x1024xbf16>, vector<1024x128xbf16>, vector<2x128xf32> -> vector<2x128xf32>
    %7 = arith.maximumf %3, %6 : vector<2x128xf32>
    %c0_6 = arith.constant 0 : index
    %c0_7 = arith.constant 0 : index
    %8 = vector.load %arg4[%c0_6, %c0_7] : memref<1x128xf32, #tpu.memory_space<vmem>>, vector<1x128xf32>
    %9 = vector.broadcast %8 : vector<1x128xf32> to vector<2x128xf32>
    %10 = arith.addf %7, %9 : vector<2x128xf32>
    %cst_8 = arith.constant 0.000000e+00 : f32
    %11 = vector.broadcast %cst_8 : f32 to vector<2x128xf32>
    %12 = arith.maximumf %10, %11 : vector<2x128xf32>
    %13 = arith.truncf %12 : vector<2x128xf32> to vector<2x128xbf16>
    %c0_9 = arith.constant 0 : index
    %c0_10 = arith.constant 0 : index
    %14 = vector.load %arg5[%c0_9, %c0_10] : memref<128x128xbf16, #tpu.memory_space<vmem>>, vector<128x128xbf16>
    %cst_11 = arith.constant dense<0.000000e+00> : vector<2x128xf32>
    %15 = tpu.matmul %13, %14, %cst_11 {dimension_numbers = #tpu.dot_dimension_numbers<[1], [0], [0], [1], [0, 0, 1, 1], [], []>} : vector<2x128xbf16>, vector<128x128xbf16>, vector<2x128xf32> -> vector<2x128xf32>
    %c0_12 = arith.constant 0 : index
    %c0_13 = arith.constant 0 : index
    %16 = vector.load %arg6[%c0_12, %c0_13] : memref<1x128xf32, #tpu.memory_space<vmem>>, vector<1x128xf32>
    %17 = vector.broadcast %16 : vector<1x128xf32> to vector<2x128xf32>
    %18 = arith.addf %15, %17 : vector<2x128xf32>
    %cst_14 = arith.constant 0.000000e+00 : f32
    %19 = vector.broadcast %cst_14 : f32 to vector<2x128xf32>
    %20 = arith.maximumf %18, %19 : vector<2x128xf32>
    %c0_15 = arith.constant 0 : index
    %c0_16 = arith.constant 0 : index
    %21 = vector.load %arg7[%c0_15, %c0_16] : memref<128x128xf32, #tpu.memory_space<vmem>>, vector<128x128xf32>
    %cst_17 = arith.constant dense<0.000000e+00> : vector<2x128xf32>
    %22 = tpu.matmul %20, %21, %cst_17 {dimension_numbers = #tpu.dot_dimension_numbers<[1], [0], [0], [1], [0, 0, 1, 1], [], []>} : vector<2x128xf32>, vector<128x128xf32>, vector<2x128xf32> -> vector<2x128xf32>
    %c0_18 = arith.constant 0 : index
    %c0_19 = arith.constant 0 : index
    %23 = vector.load %arg8[%c0_18, %c0_19] : memref<1x128xf32, #tpu.memory_space<vmem>>, vector<1x128xf32>
    %24 = vector.broadcast %23 : vector<1x128xf32> to vector<2x128xf32>
    %25 = arith.addf %22, %24 : vector<2x128xf32>
    %c0_20 = arith.constant 0 : index
    %c0_21 = arith.constant 0 : index
    %26 = vector.load %arg9[%c0_20, %c0_21] : memref<2x128xf32, #tpu.memory_space<vmem>>, vector<2x128xf32>
    tpu.vector_store %arg9[%c0_20, %c0_21], %25 {strides = array<i32>} : memref<2x128xf32, #tpu.memory_space<vmem>>, vector<2x128xf32>,
    return
  }
  func.func @transform_0(%arg0: i32) -> (i32, i32) {
    %c0_i32 = arith.constant 0 : i32
    %c0_i32_0 = arith.constant 0 : i32
    return %arg0, %c0_i32 : i32, i32
  }
  func.func @transform_1(%arg0: i32) -> (i32, i32) {
    %c0_i32 = arith.constant 0 : i32
    %c0_i32_0 = arith.constant 0 : i32
    return %arg0, %c0_i32 : i32, i32
  }
  func.func @transform_2(%arg0: i32) -> (i32, i32) {
    %c0_i32 = arith.constant 0 : i32
    %c0_i32_0 = arith.constant 0 : i32
    %c0_i32_1 = arith.constant 0 : i32
    return %c0_i32, %c0_i32_0 : i32, i32
  }
  func.func @transform_3(%arg0: i32) -> (i32, i32) {
    %c0_i32 = arith.constant 0 : i32
    %c0_i32_0 = arith.constant 0 : i32
    %c0_i32_1 = arith.constant 0 : i32
    return %c0_i32, %c0_i32_0 : i32, i32
  }
  func.func @transform_4(%arg0: i32) -> (i32, i32) {
    %c0_i32 = arith.constant 0 : i32
    %c0_i32_0 = arith.constant 0 : i32
    %c0_i32_1 = arith.constant 0 : i32
    return %c0_i32, %c0_i32_0 : i32, i32
  }
  func.func @transform_5(%arg0: i32) -> (i32, i32) {
    %c0_i32 = arith.constant 0 : i32
    %c0_i32_0 = arith.constant 0 : i32
    %c0_i32_1 = arith.constant 0 : i32
    return %c0_i32, %c0_i32_0 : i32, i32
  }
  func.func @transform_6(%arg0: i32) -> (i32, i32) {
    %c0_i32 = arith.constant 0 : i32
    %c0_i32_0 = arith.constant 0 : i32
    %c0_i32_1 = arith.constant 0 : i32
    return %c0_i32, %c0_i32_0 : i32, i32
  }
  func.func @transform_7(%arg0: i32) -> (i32, i32) {
    %c0_i32 = arith.constant 0 : i32
    %c0_i32_0 = arith.constant 0 : i32
    %c0_i32_1 = arith.constant 0 : i32
    return %c0_i32, %c0_i32_0 : i32, i32
  }
  func.func @transform_8(%arg0: i32) -> (i32, i32) {
    %c0_i32 = arith.constant 0 : i32
    %c0_i32_0 = arith.constant 0 : i32
    return %arg0, %c0_i32 : i32, i32
  }
}

</mosaic_0001>

<llo_original>
// kernel: tpu_custom_call.1
$region0: #{tpu_custom_call.1}
  #allocation0 [shape = 'u32[]', space=smem, size = 0x4, offset = 0x4, fixed_abs, tag = 'smem constant byte address 0x4 - core index']
  #allocation1 [shape = 'u32[72,128]{1,0:T(1,128)}', space=vmem, size = 0x9000, scoped, tag = 'internal scratch']
  %s0 = inlined_call_operand.hbm [shape: f32[2,1024], index: 0, kind: input, shape index: {}]
  %s1 = inlined_call_operand.hbm [shape: f32[2,1024], index: 1, kind: input, shape index: {}]
  %s2 = inlined_call_operand.hbm [shape: bf16[1024,128], index: 2, kind: input, shape index: {}]
  %s3 = inlined_call_operand.vmem [shape: f32[1,128], index: 3, kind: input, shape index: {}]
  %s4 = inlined_call_operand.hbm [shape: bf16[128,128], index: 4, kind: input, shape index: {}]
  %s5 = inlined_call_operand.vmem [shape: f32[1,128], index: 5, kind: input, shape index: {}]
  %s6 = inlined_call_operand.hbm [shape: f32[128,128], index: 6, kind: input, shape index: {}]
  %s7 = inlined_call_operand.vmem [shape: f32[1,128], index: 7, kind: input, shape index: {}]
  %s8 = inlined_call_operand.hbm [shape: f32[2,128], index: 8, kind: output, shape index: {}]
  %s9 = sld [smem:[#allocation0]]
  $region62: #{tpu_custom_call.1} parent=0
    _
  %s11 = ssub.s32 1, %s9
  %s12 = scalar_select 0, %s11, %s9
  $region1: #{tpu_custom_call.1} parent=0
    #allocation2 [shape = 'u8[8192]{0}', space=vmem, size = 0x2000, scoped, tag = 'input window, operand 0, single buffered']
    #allocation3 [shape = 's32[1]{0}', space=sflag, size = 0x4, scoped, tag = 'scoped memory for tpu_custom_call.1']
    #allocation4 [shape = 's32[1]{0}', space=sflag, size = 0x4, scoped, tag = 'scoped memory for tpu_custom_call.1']
    #allocation5 [shape = 'u8[8192]{0}', space=vmem, size = 0x2000, scoped, tag = 'input window, operand 1, single buffered']
    #allocation6 [shape = 's32[1]{0}', space=sflag, size = 0x4, scoped, tag = 'scoped memory for tpu_custom_call.1']
    #allocation7 [shape = 'u8[262144]{0}', space=vmem, size = 0x40000, scoped, tag = 'input window, operand 2, single buffered']
    #allocation8 [shape = 'u8[32768]{0}', space=vmem, size = 0x8000, scoped, tag = 'input window, operand 4, single buffered']
    #allocation9 [shape = 's32[1]{0}', space=sflag, size = 0x4, scoped, tag = 'scoped memory for tpu_custom_call.1']
    #allocation10 [shape = 'u8[65536]{0}', space=vmem, size = 0x10000, scoped, tag = 'input window, operand 6, single buffered']
    #allocation11 [shape = 'u8[1024]{0}', space=vmem, size = 0x400, scoped, tag = 'output window, operand 0, single buffered']
    %13 = vsyncpa [#allocation3], 0
    %14 = vsyncpa [#allocation6], 0
    %15 = vsyncpa [#allocation9], 0
    %16 = vsyncpa [#allocation4], 0
    // Predicated region
    $region2: #{tpu_custom_call.1} parent=1 // pred_check
      _
    $region3: #{tpu_custom_call.1} parent=1 // pred_check_branch
      %18 = sbr.rel (0) target = $region5
    $region4: #{tpu_custom_call.1} parent=1 // pred_region
      %20 = vsyncadd [#allocation3], 0
      %s22 = sshll.u32 %s0, 4
      %s23 = int_to_ptr.hbm [resolvable:$true] %s22
      %s24 = sshll.u32 [#allocation2], 4
      %s25 = int_to_ptr.vmem [resolvable:$true] %s24
      %27 = dma.hbm_to_vmem [thread:$0]  %s23, 256, %s25, [#allocation3]
    $region5: #{tpu_custom_call.1} parent=1 // pred_fallthru
      _
    // Predicated region
    $region6: #{tpu_custom_call.1} parent=1 // pred_check
      _
    $region7: #{tpu_custom_call.1} parent=1 // pred_check_branch
      %29 = sbr.rel (0) target = $region9
    $region8: #{tpu_custom_call.1} parent=1 // pred_region
      %31 = vsyncadd [#allocation6], 0
      %s33 = sshll.u32 %s1, 4
      %s34 = int_to_ptr.hbm [resolvable:$true] %s33
      %s35 = sshll.u32 [#allocation5], 4
      %s36 = int_to_ptr.vmem [resolvable:$true] %s35
      %38 = dma.hbm_to_vmem [thread:$0]  %s34, 256, %s36, [#allocation6]
    $region9: #{tpu_custom_call.1} parent=1 // pred_fallthru
      _
    // Predicated region
    $region10: #{tpu_custom_call.1} parent=1 // pred_check
      _
    $region11: #{tpu_custom_call.1} parent=1 // pred_check_branch
      %40 = sbr.rel (0) target = $region13
    $region12: #{tpu_custom_call.1} parent=1 // pred_region
      %42 = vsyncadd [#allocation6], 0
      %s43 = sshll.u32 %s2, 4
      %s44 = int_to_ptr.hbm [resolvable:$true] %s43
      %s45 = sshll.u32 [#allocation7], 4
      %s46 = int_to_ptr.vmem [resolvable:$true] %s45
      %51 = dma.hbm_to_vmem [thread:$0]  %s44, 8192, %s46, [#allocation6], 64, 64, 4
    $region13: #{tpu_custom_call.1} parent=1 // pred_fallthru
      _
    // Predicated region
    $region14: #{tpu_custom_call.1} parent=1 // pred_check
      _
    $region15: #{tpu_custom_call.1} parent=1 // pred_check_branch
      %53 = sbr.rel (0) target = $region17
    $region16: #{tpu_custom_call.1} parent=1 // pred_region
      _
    $region17: #{tpu_custom_call.1} parent=1 // pred_fallthru
      _
    // Predicated region
    $region18: #{tpu_custom_call.1} parent=1 // pred_check
      _
    $region19: #{tpu_custom_call.1} parent=1 // pred_check_branch
      %55 = sbr.rel (0) target = $region21
    $region20: #{tpu_custom_call.1} parent=1 // pred_region
      %57 = vsyncadd [#allocation9], 0
      %s58 = sshll.u32 %s4, 4
      %s59 = int_to_ptr.hbm [resolvable:$true] %s58
      %s60 = sshll.u32 [#allocation8], 4
      %s61 = int_to_ptr.vmem [resolvable:$true] %s60
      %66 = dma.hbm_to_vmem [thread:$0]  %s59, 1024, %s61, [#allocation9], 64, 64, 4
    $region21: #{tpu_custom_call.1} parent=1 // pred_fallthru
      _
    // Predicated region
    $region22: #{tpu_custom_call.1} parent=1 // pred_check
      _
    $region23: #{tpu_custom_call.1} parent=1 // pred_check_branch
      %68 = sbr.rel (0) target = $region25
    $region24: #{tpu_custom_call.1} parent=1 // pred_region
      _
    $region25: #{tpu_custom_call.1} parent=1 // pred_fallthru
      _
    // Predicated region
    $region26: #{tpu_custom_call.1} parent=1 // pred_check
      _
    $region27: #{tpu_custom_call.1} parent=1 // pred_check_branch
      %70 = sbr.rel (0) target = $region29
    $region28: #{tpu_custom_call.1} parent=1 // pred_region
      %72 = vsyncadd [#allocation9], 0
      %s73 = sshll.u32 %s6, 4
      %s74 = int_to_ptr.hbm [resolvable:$true] %s73
      %s75 = sshll.u32 [#allocation10], 4
      %s76 = int_to_ptr.vmem [resolvable:$true] %s75
      %81 = dma.hbm_to_vmem [thread:$0]  %s74, 2048, %s76, [#allocation9], 128, 128, 8
    $region29: #{tpu_custom_call.1} parent=1 // pred_fallthru
      _
    // Predicated region
    $region30: #{tpu_custom_call.1} parent=1 // pred_check
      _
    $region31: #{tpu_custom_call.1} parent=1 // pred_check_branch
      %83 = sbr.rel (0) target = $region33
    $region32: #{tpu_custom_call.1} parent=1 // pred_region
      _
    $region33: #{tpu_custom_call.1} parent=1 // pred_fallthru
      _
    // Predicated region
    $region34: #{tpu_custom_call.1} parent=1 // pred_check
      _
    $region35: #{tpu_custom_call.1} parent=1 // pred_check_branch
      %85 = sbr.rel (0) target = $region37
    $region36: #{tpu_custom_call.1} parent=1 // pred_region
      %87 = dma.done [#allocation3], 256
    $region37: #{tpu_custom_call.1} parent=1 // pred_fallthru
      _
    // Predicated region
    $region38: #{tpu_custom_call.1} parent=1 // pred_check
      _
    $region39: #{tpu_custom_call.1} parent=1 // pred_check_branch
      %89 = sbr.rel (0) target = $region41
    $region40: #{tpu_custom_call.1} parent=1 // pred_region
      %91 = dma.done [#allocation6], 256
    $region41: #{tpu_custom_call.1} parent=1 // pred_fallthru
      _
    // Predicated region
    $region42: #{tpu_custom_call.1} parent=1 // pred_check
      _
    $region43: #{tpu_custom_call.1} parent=1 // pred_check_branch
      %93 = sbr.rel (0) target = $region45
    $region44: #{tpu_custom_call.1} parent=1 // pred_region
      %95 = dma.done [#allocation6], 8192
    $region45: #{tpu_custom_call.1} parent=1 // pred_fallthru
      _
    // Predicated region
    $region46: #{tpu_custom_call.1} parent=1 // pred_check
      _
    $region47: #{tpu_custom_call.1} parent=1 // pred_check_branch
      %97 = sbr.rel (0) target = $region49
    $region48: #{tpu_custom_call.1} parent=1 // pred_region
      %99 = dma.done [#allocation9], 1024
    $region49: #{tpu_custom_call.1} parent=1 // pred_fallthru
      _
    // Predicated region
    $region50: #{tpu_custom_call.1} parent=1 // pred_check
      _
    $region51: #{tpu_custom_call.1} parent=1 // pred_check_branch
      %101 = sbr.rel (0) target = $region53
    $region52: #{tpu_custom_call.1} parent=1 // pred_region
      %103 = dma.done [#allocation9], 2048
    $region53: #{tpu_custom_call.1} parent=1 // pred_fallthru
      _
    %v104 = vld [vmem:[#allocation7] sm:$0xf]
    %v105 = vld [vmem:[#allocation7 + $0x4] sm:$0xf]
    %v106 = vld [vmem:[#allocation7 + $0x8] sm:$0xf]
    %v107 = vld [vmem:[#allocation7 + $0xc] sm:$0xf]
    %v108 = vld [vmem:[#allocation7 + $0x10] sm:$0xf]
    %v109 = vld [vmem:[#allocation7 + $0x14] sm:$0xf]
    %v110 = vld [vmem:[#allocation7 + $0x18] sm:$0xf]
    %v111 = vld [vmem:[#allocation7 + $0x1c] sm:$0xf]
    %v112 = vld [vmem:[#allocation7 + $0x20] sm:$0xf]
    %v113 = vld [vmem:[#allocation7 + $0x24] sm:$0xf]
    %v114 = vld [vmem:[#allocation7 + $0x28] sm:$0xf]
    %v115 = vld [vmem:[#allocation7 + $0x2c] sm:$0xf]
    %v116 = vld [vmem:[#allocation7 + $0x30] sm:$0xf]
    %v117 = vld [vmem:[#allocation7 + $0x34] sm:$0xf]
    %v118 = vld [vmem:[#allocation7 + $0x38] sm:$0xf]
    %v119 = vld [vmem:[#allocation7 + $0x3c] sm:$0xf]
    %v120 = vld [vmem:[#allocation7 + $0x40] sm:$0xf]
    %v121 = vld [vmem:[#allocation7 + $0x44] sm:$0xf]
    %v122 = vld [vmem:[#allocation7 + $0x48] sm:$0xf]
    %v123 = vld [vmem:[#allocation7 + $0x4c] sm:$0xf]
    %v124 = vld [vmem:[#allocation7 + $0x50] sm:$0xf]
    %v125 = vld [vmem:[#allocation7 + $0x54] sm:$0xf]
    %v126 = vld [vmem:[#allocation7 + $0x58] sm:$0xf]
    %v127 = vld [vmem:[#allocation7 + $0x5c] sm:$0xf]
    %v128 = vld [vmem:[#allocation7 + $0x60] sm:$0xf]
    %v129 = vld [vmem:[#allocation7 + $0x64] sm:$0xf]
    %v130 = vld [vmem:[#allocation7 + $0x68] sm:$0xf]
    %v131 = vld [vmem:[#allocation7 + $0x6c] sm:$0xf]
    %v132 = vld [vmem:[#allocation7 + $0x70] sm:$0xf]
    %v133 = vld [vmem:[#allocation7 + $0x74] sm:$0xf]
    %v134 = vld [vmem:[#allocation7 + $0x78] sm:$0xf]
    %v135 = vld [vmem:[#allocation7 + $0x7c] sm:$0xf]
    %v136 = vld [vmem:[#allocation7 + $0x80] sm:$0xf]
    %v137 = vld [vmem:[#allocation7 + $0x84] sm:$0xf]
    %v138 = vld [vmem:[#allocation7 + $0x88] sm:$0xf]
    %v139 = vld [vmem:[#allocation7 + $0x8c] sm:$0xf]
    %v140 = vld [vmem:[#allocation7 + $0x90] sm:$0xf]
    %v141 = vld [vmem:[#allocation7 + $0x94] sm:$0xf]
    %v142 = vld [vmem:[#allocation7 + $0x98] sm:$0xf]
    %v143 = vld [vmem:[#allocation7 + $0x9c] sm:$0xf]
    %v144 = vld [vmem:[#allocation7 + $0xa0] sm:$0xf]
    %v145 = vld [vmem:[#allocation7 + $0xa4] sm:$0xf]
    %v146 = vld [vmem:[#allocation7 + $0xa8] sm:$0xf]
    %v147 = vld [vmem:[#allocation7 + $0xac] sm:$0xf]
    %v148 = vld [vmem:[#allocation7 + $0xb0] sm:$0xf]
    %v149 = vld [vmem:[#allocation7 + $0xb4] sm:$0xf]
    %v150 = vld [vmem:[#allocation7 + $0xb8] sm:$0xf]
    %v151 = vld [vmem:[#allocation7 + $0xbc] sm:$0xf]
    %v152 = vld [vmem:[#allocation7 + $0xc0] sm:$0xf]
    %v153 = vld [vmem:[#allocation7 + $0xc4] sm:$0xf]
    %v154 = vld [vmem:[#allocation7 + $0xc8] sm:$0xf]
    %v155 = vld [vmem:[#allocation7 + $0xcc] sm:$0xf]
    %v156 = vld [vmem:[#allocation7 + $0xd0] sm:$0xf]
    %v157 = vld [vmem:[#allocation7 + $0xd4] sm:$0xf]
    %v158 = vld [vmem:[#allocation7 + $0xd8] sm:$0xf]
    %v159 = vld [vmem:[#allocation7 + $0xdc] sm:$0xf]
    %v160 = vld [vmem:[#allocation7 + $0xe0] sm:$0xf]
    %v161 = vld [vmem:[#allocation7 + $0xe4] sm:$0xf]
    %v162 = vld [vmem:[#allocation7 + $0xe8] sm:$0xf]
    %v163 = vld [vmem:[#allocation7 + $0xec] sm:$0xf]
    %v164 = vld [vmem:[#allocation7 + $0xf0] sm:$0xf]
    %v165 = vld [vmem:[#allocation7 + $0xf4] sm:$0xf]
    %v166 = vld [vmem:[#allocation7 + $0xf8] sm:$0xf]
    %v167 = vld [vmem:[#allocation7 + $0xfc] sm:$0xf]
    %v168 = vld [vmem:[#allocation7 + $0x100] sm:$0xf]
    %v169 = vld [vmem:[#allocation7 + $0x104] sm:$0xf]
    %v170 = vld [vmem:[#allocation7 + $0x108] sm:$0xf]
    %v171 = vld [vmem:[#allocation7 + $0x10c] sm:$0xf]
    %v172 = vld [vmem:[#allocation7 + $0x110] sm:$0xf]
    %v173 = vld [vmem:[#allocation7 + $0x114] sm:$0xf]
    %v174 = vld [vmem:[#allocation7 + $0x118] sm:$0xf]
    %v175 = vld [vmem:[#allocation7 + $0x11c] sm:$0xf]
    %v176 = vld [vmem:[#allocation7 + $0x120] sm:$0xf]
    %v177 = vld [vmem:[#allocation7 + $0x124] sm:$0xf]
    %v178 = vld [vmem:[#allocation7 + $0x128] sm:$0xf]
    %v179 = vld [vmem:[#allocation7 + $0x12c] sm:$0xf]
    %v180 = vld [vmem:[#allocation7 + $0x130] sm:$0xf]
    %v181 = vld [vmem:[#allocation7 + $0x134] sm:$0xf]
    %v182 = vld [vmem:[#allocation7 + $0x138] sm:$0xf]
    %v183 = vld [vmem:[#allocation7 + $0x13c] sm:$0xf]
    %v184 = vld [vmem:[#allocation7 + $0x140] sm:$0xf]
    %v185 = vld [vmem:[#allocation7 + $0x144] sm:$0xf]
    %v186 = vld [vmem:[#allocation7 + $0x148] sm:$0xf]
    %v187 = vld [vmem:[#allocation7 + $0x14c] sm:$0xf]
    %v188 = vld [vmem:[#allocation7 + $0x150] sm:$0xf]
    %v189 = vld [vmem:[#allocation7 + $0x154] sm:$0xf]
    %v190 = vld [vmem:[#allocation7 + $0x158] sm:$0xf]
    %v191 = vld [vmem:[#allocation7 + $0x15c] sm:$0xf]
    %v192 = vld [vmem:[#allocation7 + $0x160] sm:$0xf]
    %v193 = vld [vmem:[#allocation7 + $0x164] sm:$0xf]
    %v194 = vld [vmem:[#allocation7 + $0x168] sm:$0xf]
    %v195 = vld [vmem:[#allocation7 + $0x16c] sm:$0xf]
    %v196 = vld [vmem:[#allocation7 + $0x170] sm:$0xf]
    %v197 = vld [vmem:[#allocation7 + $0x174] sm:$0xf]
    %v198 = vld [vmem:[#allocation7 + $0x178] sm:$0xf]
    %v199 = vld [vmem:[#allocation7 + $0x17c] sm:$0xf]
    %v200 = vld [vmem:[#allocation7 + $0x180] sm:$0xf]
    %v201 = vld [vmem:[#allocation7 + $0x184] sm:$0xf]
    %v202 = vld [vmem:[#allocation7 + $0x188] sm:$0xf]
    %v203 = vld [vmem:[#allocation7 + $0x18c] sm:$0xf]
    %v204 = vld [vmem:[#allocation7 + $0x190] sm:$0xf]
    %v205 = vld [vmem:[#allocation7 + $0x194] sm:$0xf]
    %v206 = vld [vmem:[#allocation7 + $0x198] sm:$0xf]
    %v207 = vld [vmem:[#allocation7 + $0x19c] sm:$0xf]
    %v208 = vld [vmem:[#allocation7 + $0x1a0] sm:$0xf]
    %v209 = vld [vmem:[#allocation7 + $0x1a4] sm:$0xf]
    %v210 = vld [vmem:[#allocation7 + $0x1a8] sm:$0xf]
    %v211 = vld [vmem:[#allocation7 + $0x1ac] sm:$0xf]
    %v212 = vld [vmem:[#allocation7 + $0x1b0] sm:$0xf]
    %v213 = vld [vmem:[#allocation7 + $0x1b4] sm:$0xf]
    %v214 = vld [vmem:[#allocation7 + $0x1b8] sm:$0xf]
    %v215 = vld [vmem:[#allocation7 + $0x1bc] sm:$0xf]
    %v216 = vld [vmem:[#allocation7 + $0x1c0] sm:$0xf]
    %v217 = vld [vmem:[#allocation7 + $0x1c4] sm:$0xf]
    %v218 = vld [vmem:[#allocation7 + $0x1c8] sm:$0xf]
    %v219 = vld [vmem:[#allocation7 + $0x1cc] sm:$0xf]
    %v220 = vld [vmem:[#allocation7 + $0x1d0] sm:$0xf]
    %v221 = vld [vmem:[#allocation7 + $0x1d4] sm:$0xf]
    %v222 = vld [vmem:[#allocation7 + $0x1d8] sm:$0xf]
    %v223 = vld [vmem:[#allocation7 + $0x1dc] sm:$0xf]
    %v224 = vld [vmem:[#allocation7 + $0x1e0] sm:$0xf]
    %v225 = vld [vmem:[#allocation7 + $0x1e4] sm:$0xf]
    %v226 = vld [vmem:[#allocation7 + $0x1e8] sm:$0xf]
    %v227 = vld [vmem:[#allocation7 + $0x1ec] sm:$0xf]
    %v228 = vld [vmem:[#allocation7 + $0x1f0] sm:$0xf]
    %v229 = vld [vmem:[#allocation7 + $0x1f4] sm:$0xf]
    %v230 = vld [vmem:[#allocation7 + $0x1f8] sm:$0xf]
    %v231 = vld [vmem:[#allocation7 + $0x1fc] sm:$0xf]
    %v232 = vld [vmem:[#allocation2] sm:$0xff]
    %v233 = vld [vmem:[#allocation2 + $0x8] sm:$0xff]
    %236 = vst [vmem:[#allocation1] ss:$4 sm:$0xff] %v232
    %s237 = scalar_lea.vmem [#allocation1], 32
    %238 = vst [vmem:[%s237] ss:$4 sm:$0xff] %v233
    %v239 = vld.sshfl [vmem:[#allocation1] sm:$0xff pattern:$0x73625140]
    %v240 = vld.sshfl [vmem:[#allocation1 + $0x8] sm:$0xff pattern:$0x73625140]
    %v241 = vld.sshfl [vmem:[#allocation1 + $0x10] sm:$0xff pattern:$0x73625140]
    %v242 = vld.sshfl [vmem:[#allocation1 + $0x18] sm:$0xff pattern:$0x73625140]
    %v243 = vld.sshfl [vmem:[#allocation1 + $0x20] sm:$0xff pattern:$0x73625140]
    %v244 = vld.sshfl [vmem:[#allocation1 + $0x28] sm:$0xff pattern:$0x73625140]
    %v245 = vld.sshfl [vmem:[#allocation1 + $0x30] sm:$0xff pattern:$0x73625140]
    %v246 = vld.sshfl [vmem:[#allocation1 + $0x38] sm:$0xff pattern:$0x73625140]
    %v255 = vpack.c.bf16 %v239, %v239
    %v256 = vpack.c.bf16 %v240, %v240
    %v257 = vpack.c.bf16 %v241, %v241
    %v258 = vpack.c.bf16 %v242, %v242
    %v259 = vpack.c.bf16 %v243, %v243
    %v260 = vpack.c.bf16 %v244, %v244
    %v261 = vpack.c.bf16 %v245, %v245
    %v262 = vpack.c.bf16 %v246, %v246
    %v391 = vunpack.c.l.b16 %v104
    %v392 = vunpack.c.l.b16 %v105
    %v393 = vunpack.c.l.b16 %v106
    %v394 = vunpack.c.l.b16 %v107
    %v395 = vunpack.c.l.b16 %v108
    %v396 = vunpack.c.l.b16 %v109
    %v397 = vunpack.c.l.b16 %v110
    %v398 = vunpack.c.l.b16 %v111
    %v399 = vunpack.c.l.b16 %v112
    %v400 = vunpack.c.l.b16 %v113
    %v401 = vunpack.c.l.b16 %v114
    %v402 = vunpack.c.l.b16 %v115
    %v403 = vunpack.c.l.b16 %v116
    %v404 = vunpack.c.l.b16 %v117
    %v405 = vunpack.c.l.b16 %v118
    %v406 = vunpack.c.l.b16 %v119
    %v407 = vunpack.c.l.b16 %v120
    %v408 = vunpack.c.l.b16 %v121
    %v409 = vunpack.c.l.b16 %v122
    %v410 = vunpack.c.l.b16 %v123
    %v411 = vunpack.c.l.b16 %v124
    %v412 = vunpack.c.l.b16 %v125
    %v413 = vunpack.c.l.b16 %v126
    %v414 = vunpack.c.l.b16 %v127
    %v415 = vunpack.c.l.b16 %v128
    %v416 = vunpack.c.l.b16 %v129
    %v417 = vunpack.c.l.b16 %v130
    %v418 = vunpack.c.l.b16 %v131
    %v419 = vunpack.c.l.b16 %v132
    %v420 = vunpack.c.l.b16 %v133
    %v421 = vunpack.c.l.b16 %v134
    %v422 = vunpack.c.l.b16 %v135
    %v423 = vunpack.c.l.b16 %v136
    %v424 = vunpack.c.l.b16 %v137
    %v425 = vunpack.c.l.b16 %v138
    %v426 = vunpack.c.l.b16 %v139
    %v427 = vunpack.c.l.b16 %v140
    %v428 = vunpack.c.l.b16 %v141
    %v429 = vunpack.c.l.b16 %v142
    %v430 = vunpack.c.l.b16 %v143
    %v431 = vunpack.c.l.b16 %v144
    %v432 = vunpack.c.l.b16 %v145
    %v433 = vunpack.c.l.b16 %v146
    %v434 = vunpack.c.l.b16 %v147
    %v435 = vunpack.c.l.b16 %v148
    %v436 = vunpack.c.l.b16 %v149
    %v437 = vunpack.c.l.b16 %v150
    %v438 = vunpack.c.l.b16 %v151
    %v439 = vunpack.c.l.b16 %v152
    %v440 = vunpack.c.l.b16 %v153
    %v441 = vunpack.c.l.b16 %v154
    %v442 = vunpack.c.l.b16 %v155
    %v443 = vunpack.c.l.b16 %v156
    %v444 = vunpack.c.l.b16 %v157
    %v445 = vunpack.c.l.b16 %v158
    %v446 = vunpack.c.l.b16 %v159
    %v447 = vunpack.c.l.b16 %v160
    %v448 = vunpack.c.l.b16 %v161
    %v449 = vunpack.c.l.b16 %v162
    %v450 = vunpack.c.l.b16 %v163
    %v451 = vunpack.c.l.b16 %v164
    %v452 = vunpack.c.l.b16 %v165
    %v453 = vunpack.c.l.b16 %v166
    %v454 = vunpack.c.l.b16 %v167
    %v455 = vunpack.c.l.b16 %v168
    %v456 = vunpack.c.l.b16 %v169
    %v457 = vunpack.c.l.b16 %v170
    %v458 = vunpack.c.l.b16 %v171
    %v459 = vunpack.c.l.b16 %v172
    %v460 = vunpack.c.l.b16 %v173
    %v461 = vunpack.c.l.b16 %v174
    %v462 = vunpack.c.l.b16 %v175
    %v463 = vunpack.c.l.b16 %v176
    %v464 = vunpack.c.l.b16 %v177
    %v465 = vunpack.c.l.b16 %v178
    %v466 = vunpack.c.l.b16 %v179
    %v467 = vunpack.c.l.b16 %v180
    %v468 = vunpack.c.l.b16 %v181
    %v469 = vunpack.c.l.b16 %v182
    %v470 = vunpack.c.l.b16 %v183
    %v471 = vunpack.c.l.b16 %v184
    %v472 = vunpack.c.l.b16 %v185
    %v473 = vunpack.c.l.b16 %v186
    %v474 = vunpack.c.l.b16 %v187
    %v475 = vunpack.c.l.b16 %v188
    %v476 = vunpack.c.l.b16 %v189
    %v477 = vunpack.c.l.b16 %v190
    %v478 = vunpack.c.l.b16 %v191
    %v479 = vunpack.c.l.b16 %v192
    %v480 = vunpack.c.l.b16 %v193
    %v481 = vunpack.c.l.b16 %v194
    %v482 = vunpack.c.l.b16 %v195
    %v483 = vunpack.c.l.b16 %v196
    %v484 = vunpack.c.l.b16 %v197
    %v485 = vunpack.c.l.b16 %v198
    %v486 = vunpack.c.l.b16 %v199
    %v487 = vunpack.c.l.b16 %v200
    %v488 = vunpack.c.l.b16 %v201
    %v489 = vunpack.c.l.b16 %v202
    %v490 = vunpack.c.l.b16 %v203
    %v491 = vunpack.c.l.b16 %v204
    %v492 = vunpack.c.l.b16 %v205
    %v493 = vunpack.c.l.b16 %v206
    %v494 = vunpack.c.l.b16 %v207
    %v495 = vunpack.c.l.b16 %v208
    %v496 = vunpack.c.l.b16 %v209
    %v497 = vunpack.c.l.b16 %v210
    %v498 = vunpack.c.l.b16 %v211
    %v499 = vunpack.c.l.b16 %v212
    %v500 = vunpack.c.l.b16 %v213
    %v501 = vunpack.c.l.b16 %v214
    %v502 = vunpack.c.l.b16 %v215
    %v503 = vunpack.c.l.b16 %v216
    %v504 = vunpack.c.l.b16 %v217
    %v505 = vunpack.c.l.b16 %v218
    %v506 = vunpack.c.l.b16 %v219
    %v507 = vunpack.c.l.b16 %v220
    %v508 = vunpack.c.l.b16 %v221
    %v509 = vunpack.c.l.b16 %v222
    %v510 = vunpack.c.l.b16 %v223
    %v511 = vunpack.c.l.b16 %v224
    %v512 = vunpack.c.l.b16 %v225
    %v513 = vunpack.c.l.b16 %v226
    %v514 = vunpack.c.l.b16 %v227
    %v515 = vunpack.c.l.b16 %v228
    %v516 = vunpack.c.l.b16 %v229
    %v517 = vunpack.c.l.b16 %v230
    %v518 = vunpack.c.l.b16 %v231
    %v519 = vpack.c.b16 %v392, %v391
    %v520 = vpack.c.b16 %v394, %v393
    %v521 = vpack.c.b16 %v396, %v395
    %v522 = vpack.c.b16 %v398, %v397
    %v523 = vpack.c.b16 %v400, %v399
    %v524 = vpack.c.b16 %v402, %v401
    %v525 = vpack.c.b16 %v404, %v403
    %v526 = vpack.c.b16 %v406, %v405
    %v527 = vpack.c.b16 %v408, %v407
    %v528 = vpack.c.b16 %v410, %v409
    %v529 = vpack.c.b16 %v412, %v411
    %v530 = vpack.c.b16 %v414, %v413
    %v531 = vpack.c.b16 %v416, %v415
    %v532 = vpack.c.b16 %v418, %v417
    %v533 = vpack.c.b16 %v420, %v419
    %v534 = vpack.c.b16 %v422, %v421
    %v535 = vpack.c.b16 %v424, %v423
    %v536 = vpack.c.b16 %v426, %v425
    %v537 = vpack.c.b16 %v428, %v427
    %v538 = vpack.c.b16 %v430, %v429
    %v539 = vpack.c.b16 %v432, %v431
    %v540 = vpack.c.b16 %v434, %v433
    %v541 = vpack.c.b16 %v436, %v435
    %v542 = vpack.c.b16 %v438, %v437
    %v543 = vpack.c.b16 %v440, %v439
    %v544 = vpack.c.b16 %v442, %v441
    %v545 = vpack.c.b16 %v444, %v443
    %v546 = vpack.c.b16 %v446, %v445
    %v547 = vpack.c.b16 %v448, %v447
    %v548 = vpack.c.b16 %v450, %v449
    %v549 = vpack.c.b16 %v452, %v451
    %v550 = vpack.c.b16 %v454, %v453
    %v551 = vpack.c.b16 %v456, %v455
    %v552 = vpack.c.b16 %v458, %v457
    %v553 = vpack.c.b16 %v460, %v459
    %v554 = vpack.c.b16 %v462, %v461
    %v555 = vpack.c.b16 %v464, %v463
    %v556 = vpack.c.b16 %v466, %v465
    %v557 = vpack.c.b16 %v468, %v467
    %v558 = vpack.c.b16 %v470, %v469
    %v559 = vpack.c.b16 %v472, %v471
    %v560 = vpack.c.b16 %v474, %v473
    %v561 = vpack.c.b16 %v476, %v475
    %v562 = vpack.c.b16 %v478, %v477
    %v563 = vpack.c.b16 %v480, %v479
    %v564 = vpack.c.b16 %v482, %v481
    %v565 = vpack.c.b16 %v484, %v483
    %v566 = vpack.c.b16 %v486, %v485
    %v567 = vpack.c.b16 %v488, %v487
    %v568 = vpack.c.b16 %v490, %v489
    %v569 = vpack.c.b16 %v492, %v491
    %v570 = vpack.c.b16 %v494, %v493
    %v571 = vpack.c.b16 %v496, %v495
    %v572 = vpack.c.b16 %v498, %v497
    %v573 = vpack.c.b16 %v500, %v499
    %v574 = vpack.c.b16 %v502, %v501
    %v575 = vpack.c.b16 %v504, %v503
    %v576 = vpack.c.b16 %v506, %v505
    %v577 = vpack.c.b16 %v508, %v507
    %v578 = vpack.c.b16 %v510, %v509
    %v579 = vpack.c.b16 %v512, %v511
    %v580 = vpack.c.b16 %v514, %v513
    %v581 = vpack.c.b16 %v516, %v515
    %v582 = vpack.c.b16 %v518, %v517
    %647 = vmatpush.bf16.msra.mxu0 %v526
    %648 = vmatpush.bf16.msra.mxu0 %v525
    %649 = vmatpush.bf16.msra.mxu0 %v524
    %650 = vmatpush.bf16.msra.mxu0 %v523
    %651 = vmatpush.bf16.msra.mxu0 %v522
    %652 = vmatpush.bf16.msra.mxu0 %v521
    %653 = vmatpush.bf16.msra.mxu0 %v520
    %654 = vmatpush.bf16.msra.mxu0 %v519
    %655 = vmatmul.bf16.gmra.mxu0 %v255
    %v656 = vpop.f32.mrf.mxu0
    %v657 = vadd.f32 0.0, %v656
    %v658 = vpop.f32.mrf.mxu0
    %659 = vdwg.mxu0
    %660 = vmatpush.bf16.msra.mxu0 %v534
    %661 = vmatpush.bf16.msra.mxu0 %v533
    %662 = vmatpush.bf16.msra.mxu0 %v532
    %663 = vmatpush.bf16.msra.mxu0 %v531
    %664 = vmatpush.bf16.msra.mxu0 %v530
    %665 = vmatpush.bf16.msra.mxu0 %v529
    %666 = vmatpush.bf16.msra.mxu0 %v528
    %667 = vmatpush.bf16.msra.mxu0 %v527
    %668 = vmatmul.bf16.gmra.mxu0 %v256
    %v669 = vpop.f32.mrf.mxu0
    %v670 = vadd.f32 %v657, %v669
    %v671 = vpop.f32.mrf.mxu0
    %672 = vdwg.mxu0
    %673 = vmatpush.bf16.msra.mxu0 %v542
    %674 = vmatpush.bf16.msra.mxu0 %v541
    %675 = vmatpush.bf16.msra.mxu0 %v540
    %676 = vmatpush.bf16.msra.mxu0 %v539
    %677 = vmatpush.bf16.msra.mxu0 %v538
    %678 = vmatpush.bf16.msra.mxu0 %v537
    %679 = vmatpush.bf16.msra.mxu0 %v536
    %680 = vmatpush.bf16.msra.mxu0 %v535
    %681 = vmatmul.bf16.gmra.mxu0 %v257
    %v682 = vpop.f32.mrf.mxu0
    %v683 = vadd.f32 %v670, %v682
    %v684 = vpop.f32.mrf.mxu0
    %685 = vdwg.mxu0
    %686 = vmatpush.bf16.msra.mxu0 %v550
    %687 = vmatpush.bf16.msra.mxu0 %v549
    %688 = vmatpush.bf16.msra.mxu0 %v548
    %689 = vmatpush.bf16.msra.mxu0 %v547
    %690 = vmatpush.bf16.msra.mxu0 %v546
    %691 = vmatpush.bf16.msra.mxu0 %v545
    %692 = vmatpush.bf16.msra.mxu0 %v544
    %693 = vmatpush.bf16.msra.mxu0 %v543
    %694 = vmatmul.bf16.gmra.mxu0 %v258
    %v695 = vpop.f32.mrf.mxu0
    %v696 = vadd.f32 %v683, %v695
    %v697 = vpop.f32.mrf.mxu0
    %698 = vdwg.mxu0
    %699 = vmatpush.bf16.msra.mxu0 %v558
    %700 = vmatpush.bf16.msra.mxu0 %v557
    %701 = vmatpush.bf16.msra.mxu0 %v556
    %702 = vmatpush.bf16.msra.mxu0 %v555
    %703 = vmatpush.bf16.msra.mxu0 %v554
    %704 = vmatpush.bf16.msra.mxu0 %v553
    %705 = vmatpush.bf16.msra.mxu0 %v552
    %706 = vmatpush.bf16.msra.mxu0 %v551
    %707 = vmatmul.bf16.gmra.mxu0 %v259
    %v708 = vpop.f32.mrf.mxu0
    %v709 = vadd.f32 %v696, %v708
    %v710 = vpop.f32.mrf.mxu0
    %711 = vdwg.mxu0
    %712 = vmatpush.bf16.msra.mxu0 %v566
    %713 = vmatpush.bf16.msra.mxu0 %v565
    %714 = vmatpush.bf16.msra.mxu0 %v564
    %715 = vmatpush.bf16.msra.mxu0 %v563
    %716 = vmatpush.bf16.msra.mxu0 %v562
    %717 = vmatpush.bf16.msra.mxu0 %v561
    %718 = vmatpush.bf16.msra.mxu0 %v560
    %719 = vmatpush.bf16.msra.mxu0 %v559
    %720 = vmatmul.bf16.gmra.mxu0 %v260
    %v721 = vpop.f32.mrf.mxu0
    %v722 = vadd.f32 %v709, %v721
    %v723 = vpop.f32.mrf.mxu0
    %724 = vdwg.mxu0
    %725 = vmatpush.bf16.msra.mxu0 %v574
    %726 = vmatpush.bf16.msra.mxu0 %v573
    %727 = vmatpush.bf16.msra.mxu0 %v572
    %728 = vmatpush.bf16.msra.mxu0 %v571
    %729 = vmatpush.bf16.msra.mxu0 %v570
    %730 = vmatpush.bf16.msra.mxu0 %v569
    %731 = vmatpush.bf16.msra.mxu0 %v568
    %732 = vmatpush.bf16.msra.mxu0 %v567
    %733 = vmatmul.bf16.gmra.mxu0 %v261
    %v734 = vpop.f32.mrf.mxu0
    %v735 = vadd.f32 %v722, %v734
    %v736 = vpop.f32.mrf.mxu0
    %737 = vdwg.mxu0
    %738 = vmatpush.bf16.msra.mxu0 %v582
    %739 = vmatpush.bf16.msra.mxu0 %v581
    %740 = vmatpush.bf16.msra.mxu0 %v580
    %741 = vmatpush.bf16.msra.mxu0 %v579
    %742 = vmatpush.bf16.msra.mxu0 %v578
    %743 = vmatpush.bf16.msra.mxu0 %v577
    %744 = vmatpush.bf16.msra.mxu0 %v576
    %745 = vmatpush.bf16.msra.mxu0 %v575
    %746 = vmatmul.bf16.gmra.mxu0 %v262
    %v747 = vpop.f32.mrf.mxu0
    %v748 = vadd.f32 %v735, %v747
    %v749 = vpop.f32.mrf.mxu0
    %750 = vdwg.mxu0
    %v751 = vld [vmem:[#allocation5] sm:$0xff]
    %v752 = vld [vmem:[#allocation5 + $0x8] sm:$0xff]
    %755 = vst [vmem:[#allocation1] ss:$4 sm:$0xff] %v751
    %s756 = scalar_lea.vmem [#allocation1], 32
    %757 = vst [vmem:[%s756] ss:$4 sm:$0xff] %v752
    %v758 = vld.sshfl [vmem:[#allocation1] sm:$0xff pattern:$0x73625140]
    %v759 = vld.sshfl [vmem:[#allocation1 + $0x8] sm:$0xff pattern:$0x73625140]
    %v760 = vld.sshfl [vmem:[#allocation1 + $0x10] sm:$0xff pattern:$0x73625140]
    %v761 = vld.sshfl [vmem:[#allocation1 + $0x18] sm:$0xff pattern:$0x73625140]
    %v762 = vld.sshfl [vmem:[#allocation1 + $0x20] sm:$0xff pattern:$0x73625140]
    %v763 = vld.sshfl [vmem:[#allocation1 + $0x28] sm:$0xff pattern:$0x73625140]
    %v764 = vld.sshfl [vmem:[#allocation1 + $0x30] sm:$0xff pattern:$0x73625140]
    %v765 = vld.sshfl [vmem:[#allocation1 + $0x38] sm:$0xff pattern:$0x73625140]
    %v774 = vpack.c.bf16 %v758, %v758
    %v775 = vpack.c.bf16 %v759, %v759
    %v776 = vpack.c.bf16 %v760, %v760
    %v777 = vpack.c.bf16 %v761, %v761
    %v778 = vpack.c.bf16 %v762, %v762
    %v779 = vpack.c.bf16 %v763, %v763
    %v780 = vpack.c.bf16 %v764, %v764
    %v781 = vpack.c.bf16 %v765, %v765
    %782 = vmatpush.bf16.msra.mxu0 %v526
    %783 = vmatpush.bf16.msra.mxu0 %v525
    %784 = vmatpush.bf16.msra.mxu0 %v524
    %785 = vmatpush.bf16.msra.mxu0 %v523
    %786 = vmatpush.bf16.msra.mxu0 %v522
    %787 = vmatpush.bf16.msra.mxu0 %v521
    %788 = vmatpush.bf16.msra.mxu0 %v520
    %789 = vmatpush.bf16.msra.mxu0 %v519
    %790 = vmatmul.bf16.gmra.mxu0 %v774
    %v791 = vpop.f32.mrf.mxu0
    %v792 = vadd.f32 0.0, %v791
    %v793 = vpop.f32.mrf.mxu0
    %794 = vdwg.mxu0
    %795 = vmatpush.bf16.msra.mxu0 %v534
    %796 = vmatpush.bf16.msra.mxu0 %v533
    %797 = vmatpush.bf16.msra.mxu0 %v532
    %798 = vmatpush.bf16.msra.mxu0 %v531
    %799 = vmatpush.bf16.msra.mxu0 %v530
    %800 = vmatpush.bf16.msra.mxu0 %v529
    %801 = vmatpush.bf16.msra.mxu0 %v528
    %802 = vmatpush.bf16.msra.mxu0 %v527
    %803 = vmatmul.bf16.gmra.mxu0 %v775
    %v804 = vpop.f32.mrf.mxu0
    %v805 = vadd.f32 %v792, %v804
    %v806 = vpop.f32.mrf.mxu0
    %807 = vdwg.mxu0
    %808 = vmatpush.bf16.msra.mxu0 %v542
    %809 = vmatpush.bf16.msra.mxu0 %v541
    %810 = vmatpush.bf16.msra.mxu0 %v540
    %811 = vmatpush.bf16.msra.mxu0 %v539
    %812 = vmatpush.bf16.msra.mxu0 %v538
    %813 = vmatpush.bf16.msra.mxu0 %v537
    %814 = vmatpush.bf16.msra.mxu0 %v536
    %815 = vmatpush.bf16.msra.mxu0 %v535
    %816 = vmatmul.bf16.gmra.mxu0 %v776
    %v817 = vpop.f32.mrf.mxu0
    %v818 = vadd.f32 %v805, %v817
    %v819 = vpop.f32.mrf.mxu0
    %820 = vdwg.mxu0
    %821 = vmatpush.bf16.msra.mxu0 %v550
    %822 = vmatpush.bf16.msra.mxu0 %v549
    %823 = vmatpush.bf16.msra.mxu0 %v548
    %824 = vmatpush.bf16.msra.mxu0 %v547
    %825 = vmatpush.bf16.msra.mxu0 %v546
    %826 = vmatpush.bf16.msra.mxu0 %v545
    %827 = vmatpush.bf16.msra.mxu0 %v544
    %828 = vmatpush.bf16.msra.mxu0 %v543
    %829 = vmatmul.bf16.gmra.mxu0 %v777
    %v830 = vpop.f32.mrf.mxu0
    %v831 = vadd.f32 %v818, %v830
    %v832 = vpop.f32.mrf.mxu0
    %833 = vdwg.mxu0
    %834 = vmatpush.bf16.msra.mxu0 %v558
    %835 = vmatpush.bf16.msra.mxu0 %v557
    %836 = vmatpush.bf16.msra.mxu0 %v556
    %837 = vmatpush.bf16.msra.mxu0 %v555
    %838 = vmatpush.bf16.msra.mxu0 %v554
    %839 = vmatpush.bf16.msra.mxu0 %v553
    %840 = vmatpush.bf16.msra.mxu0 %v552
    %841 = vmatpush.bf16.msra.mxu0 %v551
    %842 = vmatmul.bf16.gmra.mxu0 %v778
    %v843 = vpop.f32.mrf.mxu0
    %v844 = vadd.f32 %v831, %v843
    %v845 = vpop.f32.mrf.mxu0
    %846 = vdwg.mxu0
    %847 = vmatpush.bf16.msra.mxu0 %v566
    %848 = vmatpush.bf16.msra.mxu0 %v565
    %849 = vmatpush.bf16.msra.mxu0 %v564
    %850 = vmatpush.bf16.msra.mxu0 %v563
    %851 = vmatpush.bf16.msra.mxu0 %v562
    %852 = vmatpush.bf16.msra.mxu0 %v561
    %853 = vmatpush.bf16.msra.mxu0 %v560
    %854 = vmatpush.bf16.msra.mxu0 %v559
    %855 = vmatmul.bf16.gmra.mxu0 %v779
    %v856 = vpop.f32.mrf.mxu0
    %v857 = vadd.f32 %v844, %v856
    %v858 = vpop.f32.mrf.mxu0
    %859 = vdwg.mxu0
    %860 = vmatpush.bf16.msra.mxu0 %v574
    %861 = vmatpush.bf16.msra.mxu0 %v573
    %862 = vmatpush.bf16.msra.mxu0 %v572
    %863 = vmatpush.bf16.msra.mxu0 %v571
    %864 = vmatpush.bf16.msra.mxu0 %v570
    %865 = vmatpush.bf16.msra.mxu0 %v569
    %866 = vmatpush.bf16.msra.mxu0 %v568
    %867 = vmatpush.bf16.msra.mxu0 %v567
    %868 = vmatmul.bf16.gmra.mxu0 %v780
    %v869 = vpop.f32.mrf.mxu0
    %v870 = vadd.f32 %v857, %v869
    %v871 = vpop.f32.mrf.mxu0
    %872 = vdwg.mxu0
    %873 = vmatpush.bf16.msra.mxu0 %v582
    %874 = vmatpush.bf16.msra.mxu0 %v581
    %875 = vmatpush.bf16.msra.mxu0 %v580
    %876 = vmatpush.bf16.msra.mxu0 %v579
    %877 = vmatpush.bf16.msra.mxu0 %v578
    %878 = vmatpush.bf16.msra.mxu0 %v577
    %879 = vmatpush.bf16.msra.mxu0 %v576
    %880 = vmatpush.bf16.msra.mxu0 %v575
    %881 = vmatmul.bf16.gmra.mxu0 %v781
    %v882 = vpop.f32.mrf.mxu0
    %v883 = vadd.f32 %v870, %v882
    %v884 = vpop.f32.mrf.mxu0
    %885 = vdwg.mxu0
    %v886 = vmax.f32 %v748, %v883
    %v887 = vld [vmem:[%s3] sm:$0x1]
    %v889 = vperm.slane %v887, 0
    %v891 = vadd.f32 %v886, %v889
    %v892 = vmax.f32 %v891, 0.0
    %v893 = vpack.c.bf16 %v892, %v892
    %v894 = vld [vmem:[#allocation8] sm:$0xf]
    %v895 = vld [vmem:[#allocation8 + $0x4] sm:$0xf]
    %v896 = vld [vmem:[#allocation8 + $0x8] sm:$0xf]
    %v897 = vld [vmem:[#allocation8 + $0xc] sm:$0xf]
    %v898 = vld [vmem:[#allocation8 + $0x10] sm:$0xf]
    %v899 = vld [vmem:[#allocation8 + $0x14] sm:$0xf]
    %v900 = vld [vmem:[#allocation8 + $0x18] sm:$0xf]
    %v901 = vld [vmem:[#allocation8 + $0x1c] sm:$0xf]
    %v902 = vld [vmem:[#allocation8 + $0x20] sm:$0xf]
    %v903 = vld [vmem:[#allocation8 + $0x24] sm:$0xf]
    %v904 = vld [vmem:[#allocation8 + $0x28] sm:$0xf]
    %v905 = vld [vmem:[#allocation8 + $0x2c] sm:$0xf]
    %v906 = vld [vmem:[#allocation8 + $0x30] sm:$0xf]
    %v907 = vld [vmem:[#allocation8 + $0x34] sm:$0xf]
    %v908 = vld [vmem:[#allocation8 + $0x38] sm:$0xf]
    %v909 = vld [vmem:[#allocation8 + $0x3c] sm:$0xf]
    %v910 = vld [vmem:[%s5] sm:$0x1]
    %v912 = vperm.slane %v910, 0
    %v930 = vunpack.c.l.b16 %v894
    %v931 = vunpack.c.l.b16 %v895
    %v932 = vunpack.c.l.b16 %v896
    %v933 = vunpack.c.l.b16 %v897
    %v934 = vunpack.c.l.b16 %v898
    %v935 = vunpack.c.l.b16 %v899
    %v936 = vunpack.c.l.b16 %v900
    %v937 = vunpack.c.l.b16 %v901
    %v938 = vunpack.c.l.b16 %v902
    %v939 = vunpack.c.l.b16 %v903
    %v940 = vunpack.c.l.b16 %v904
    %v941 = vunpack.c.l.b16 %v905
    %v942 = vunpack.c.l.b16 %v906
    %v943 = vunpack.c.l.b16 %v907
    %v944 = vunpack.c.l.b16 %v908
    %v945 = vunpack.c.l.b16 %v909
    %v946 = vpack.c.b16 %v931, %v930
    %v947 = vpack.c.b16 %v933, %v932
    %v948 = vpack.c.b16 %v935, %v934
    %v949 = vpack.c.b16 %v937, %v936
    %v950 = vpack.c.b16 %v939, %v938
    %v951 = vpack.c.b16 %v941, %v940
    %v952 = vpack.c.b16 %v943, %v942
    %v953 = vpack.c.b16 %v945, %v944
    %962 = vmatpush.bf16.msra.mxu0 %v953
    %963 = vmatpush.bf16.msra.mxu0 %v952
    %964 = vmatpush.bf16.msra.mxu0 %v951
    %965 = vmatpush.bf16.msra.mxu0 %v950
    %966 = vmatpush.bf16.msra.mxu0 %v949
    %967 = vmatpush.bf16.msra.mxu0 %v948
    %968 = vmatpush.bf16.msra.mxu0 %v947
    %969 = vmatpush.bf16.msra.mxu0 %v946
    %970 = vmatmul.bf16.gmra.mxu0 %v893
    %v971 = vpop.f32.mrf.mxu0
    %v972 = vadd.f32 %v912, %v971
    %v973 = vpop.f32.mrf.mxu0
    %974 = vdwg.mxu0
    %v975 = vmax.f32 %v972, 0.0
    %v976 = vld [vmem:[#allocation10] sm:$0xff]
    %v977 = vld [vmem:[#allocation10 + $0x8] sm:$0xff]
    %v978 = vld [vmem:[#allocation10 + $0x10] sm:$0xff]
    %v979 = vld [vmem:[#allocation10 + $0x18] sm:$0xff]
    %v980 = vld [vmem:[#allocation10 + $0x20] sm:$0xff]
    %v981 = vld [vmem:[#allocation10 + $0x28] sm:$0xff]
    %v982 = vld [vmem:[#allocation10 + $0x30] sm:$0xff]
    %v983 = vld [vmem:[#allocation10 + $0x38] sm:$0xff]
    %v984 = vld [vmem:[#allocation10 + $0x40] sm:$0xff]
    %v985 = vld [vmem:[#allocation10 + $0x48] sm:$0xff]
    %v986 = vld [vmem:[#allocation10 + $0x50] sm:$0xff]
    %v987 = vld [vmem:[#allocation10 + $0x58] sm:$0xff]
    %v988 = vld [vmem:[#allocation10 + $0x60] sm:$0xff]
    %v989 = vld [vmem:[#allocation10 + $0x68] sm:$0xff]
    %v990 = vld [vmem:[#allocation10 + $0x70] sm:$0xff]
    %v991 = vld [vmem:[#allocation10 + $0x78] sm:$0xff]
    %v992 = vld [vmem:[%s7] sm:$0x1]
    %v994 = vperm.slane %v992, 0
    %996 = vmatpush.msra.mxu0 %v991
    %997 = vmatpush.msra.mxu0 %v990
    %998 = vmatpush.msra.mxu0 %v989
    %999 = vmatpush.msra.mxu0 %v988
    %1000 = vmatpush.msra.mxu0 %v987
    %1001 = vmatpush.msra.mxu0 %v986
    %1002 = vmatpush.msra.mxu0 %v985
    %1003 = vmatpush.msra.mxu0 %v984
    %1004 = vmatpush.msra.mxu0 %v983
    %1005 = vmatpush.msra.mxu0 %v982
    %1006 = vmatpush.msra.mxu0 %v981
    %1007 = vmatpush.msra.mxu0 %v980
    %1008 = vmatpush.msra.mxu0 %v979
    %1009 = vmatpush.msra.mxu0 %v978
    %1010 = vmatpush.msra.mxu0 %v977
    %1011 = vmatpush.msra.mxu0 %v976
    %1012 = vmatmul.f32.gmra.mxu0 %v975
    %v1013 = vpop.f32.mrf.mxu0
    %v1014 = vadd.f32 %v994, %v1013
    %1015 = vdwg.mxu0
    %1016 = vst [vmem:[#allocation11] sm:$0x3] %v1014
    // Predicated region
    $region54: #{tpu_custom_call.1} parent=1 // pred_check
      _
    $region55: #{tpu_custom_call.1} parent=1 // pred_check_branch
      %1018 = sbr.rel (0) target = $region57
    $region56: #{tpu_custom_call.1} parent=1 // pred_region
      %1020 = vsyncadd [#allocation4], 0
      %s1022 = sshll.u32 [#allocation11], 4
      %s1023 = int_to_ptr.vmem [resolvable:$true] %s1022
      %s1024 = sshll.u32 %s8, 4
      %s1025 = int_to_ptr.hbm [resolvable:$true] %s1024
      %1027 = dma.vmem_to_hbm [thread:$0]  %s1023, 32, %s1025, [#allocation4]
    $region57: #{tpu_custom_call.1} parent=1 // pred_fallthru
      _
    // Predicated region
    $region58: #{tpu_custom_call.1} parent=1 // pred_check
      _
    $region59: #{tpu_custom_call.1} parent=1 // pred_check_branch
      %1029 = sbr.rel (0) target = $region61
    $region60: #{tpu_custom_call.1} parent=1 // pred_region
      %1031 = dma.done [#allocation4], 32
    $region61: #{tpu_custom_call.1} parent=1 // pred_fallthru
      _
    %1032 = vsyncpa [#allocation3], 1
    %1033 = vsyncpa [#allocation6], 1
    %1034 = vsyncpa [#allocation9], 1
    %1035 = vsyncpa [#allocation4], 1

// kernel: tpu_custom_call.1
$region0: #{tpu_custom_call.1}
  #allocation0 [shape = 'u32[]', space=smem, size = 0x4, offset = 0x4, fixed_abs, tag = 'smem constant byte address 0x4 - core index']
  #allocation1 [shape = 'u32[72,128]{1,0:T(1,128)}', space=vmem, size = 0x9000, scoped, tag = 'internal scratch']
  %s0 = inlined_call_operand.hbm [shape: f32[2,1024], index: 0, kind: input, shape index: {}]
  %s1 = inlined_call_operand.hbm [shape: f32[2,1024], index: 1, kind: input, shape index: {}]
  %s2 = inlined_call_operand.hbm [shape: bf16[1024,128], index: 2, kind: input, shape index: {}]
  %s3 = inlined_call_operand.vmem [shape: f32[1,128], index: 3, kind: input, shape index: {}]
  %s4 = inlined_call_operand.hbm [shape: bf16[128,128], index: 4, kind: input, shape index: {}]
  %s5 = inlined_call_operand.vmem [shape: f32[1,128], index: 5, kind: input, shape index: {}]
  %s6 = inlined_call_operand.hbm [shape: f32[128,128], index: 6, kind: input, shape index: {}]
  %s7 = inlined_call_operand.vmem [shape: f32[1,128], index: 7, kind: input, shape index: {}]
  %s8 = inlined_call_operand.hbm [shape: f32[2,128], index: 8, kind: output, shape index: {}]
  %s9 = sld [smem:[#allocation0]]
  $region62: #{tpu_custom_call.1} parent=0
    _
  %s11 = ssub.s32 1, %s9
  %s12 = scalar_select 0, %s11, %s9
  $region1: #{tpu_custom_call.1} parent=0
    #allocation2 [shape = 'u8[8192]{0}', space=vmem, size = 0x2000, scoped, tag = 'input window, operand 0, single buffered']
    #allocation3 [shape = 's32[1]{0}', space=sflag, size = 0x4, scoped, tag = 'scoped memory for tpu_custom_call.1']
    #allocation4 [shape = 's32[1]{0}', space=sflag, size = 0x4, scoped, tag = 'scoped memory for tpu_custom_call.1']
    #allocation5 [shape = 'u8[8192]{0}', space=vmem, size = 0x2000, scoped, tag = 'input window, operand 1, single buffered']
    #allocation6 [shape = 's32[1]{0}', space=sflag, size = 0x4, scoped, tag = 'scoped memory for tpu_custom_call.1']
    #allocation7 [shape = 'u8[262144]{0}', space=vmem, size = 0x40000, scoped, tag = 'input window, operand 2, single buffered']
    #allocation8 [shape = 'u8[32768]{0}', space=vmem, size = 0x8000, scoped, tag = 'input window, operand 4, single buffered']
    #allocation9 [shape = 's32[1]{0}', space=sflag, size = 0x4, scoped, tag = 'scoped memory for tpu_custom_call.1']
    #allocation10 [shape = 'u8[65536]{0}', space=vmem, size = 0x10000, scoped, tag = 'input window, operand 6, single buffered']
    #allocation11 [shape = 'u8[1024]{0}', space=vmem, size = 0x400, scoped, tag = 'output window, operand 0, single buffered']
    %13 = vsyncpa [#allocation3], 0
    %14 = vsyncpa [#allocation6], 0
    %15 = vsyncpa [#allocation9], 0
    %16 = vsyncpa [#allocation4], 0
    // Predicated region
    $region2: #{tpu_custom_call.1} parent=1 // pred_check
      _
    $region3: #{tpu_custom_call.1} parent=1 // pred_check_branch
      %18 = sbr.rel (0) target = $region5
    $region4: #{tpu_custom_call.1} parent=1 // pred_region
      %20 = vsyncadd [#allocation3], 0
      %s22 = sshll.u32 %s0, 4
      %s23 = int_to_ptr.hbm [resolvable:$true] %s22
      %s24 = sshll.u32 [#allocation2], 4
      %s25 = int_to_ptr.vmem [resolvable:$true] %s24
      %27 = dma.hbm_to_vmem [thread:$0]  %s23, 256, %s25, [#allocation3]
    $region5: #{tpu_custom_call.1} parent=1 // pred_fallthru
      _
    // Predicated region
    $region6: #{tpu_custom_call.1} parent=1 // pred_check
      _
    $region7: #{tpu_custom_call.1} parent=1 // pred_check_branch
      %29 = sbr.rel (0) target = $region9
    $region8: #{tpu_custom_call.1} parent=1 // pred_region
      %31 = vsyncadd [#allocation6], 0
      %s33 = sshll.u32 %s1, 4
      %s34 = int_to_ptr.hbm [resolvable:$true] %s33
      %s35 = sshll.u32 [#allocation5], 4
      %s36 = int_to_ptr.vmem [resolvable:$true] %s35
      %38 = dma.hbm_to_vmem [thread:$0]  %s34, 256, %s36, [#allocation6]
    $region9: #{tpu_custom_call.1} parent=1 // pred_fallthru
      _
    // Predicated region
    $region10: #{tpu_custom_call.1} parent=1 // pred_check
      _
    $region11: #{tpu_custom_call.1} parent=1 // pred_check_branch
      %40 = sbr.rel (0) target = $region13
    $region12: #{tpu_custom_call.1} parent=1 // pred_region
      %42 = vsyncadd [#allocation6], 0
      %s43 = sshll.u32 %s2, 4
      %s44 = int_to_ptr.hbm [resolvable:$true] %s43
      %s45 = sshll.u32 [#allocation7], 4
      %s46 = int_to_ptr.vmem [resolvable:$true] %s45
      %51 = dma.hbm_to_vmem [thread:$0]  %s44, 8192, %s46, [#allocation6], 64, 64, 4
    $region13: #{tpu_custom_call.1} parent=1 // pred_fallthru
      _
    // Predicated region
    $region14: #{tpu_custom_call.1} parent=1 // pred_check
      _
    $region15: #{tpu_custom_call.1} parent=1 // pred_check_branch
      %53 = sbr.rel (0) target = $region17
    $region16: #{tpu_custom_call.1} parent=1 // pred_region
      _
    $region17: #{tpu_custom_call.1} parent=1 // pred_fallthru
      _
    // Predicated region
    $region18: #{tpu_custom_call.1} parent=1 // pred_check
      _
    $region19: #{tpu_custom_call.1} parent=1 // pred_check_branch
      %55 = sbr.rel (0) target = $region21
    $region20: #{tpu_custom_call.1} parent=1 // pred_region
      %57 = vsyncadd [#allocation9], 0
      %s58 = sshll.u32 %s4, 4
      %s59 = int_to_ptr.hbm [resolvable:$true] %s58
      %s60 = sshll.u32 [#allocation8], 4
      %s61 = int_to_ptr.vmem [resolvable:$true] %s60
      %66 = dma.hbm_to_vmem [thread:$0]  %s59, 1024, %s61, [#allocation9], 64, 64, 4
    $region21: #{tpu_custom_call.1} parent=1 // pred_fallthru
      _
    // Predicated region
    $region22: #{tpu_custom_call.1} parent=1 // pred_check
      _
    $region23: #{tpu_custom_call.1} parent=1 // pred_check_branch
      %68 = sbr.rel (0) target = $region25
    $region24: #{tpu_custom_call.1} parent=1 // pred_region
      _
    $region25: #{tpu_custom_call.1} parent=1 // pred_fallthru
      _
    // Predicated region
    $region26: #{tpu_custom_call.1} parent=1 // pred_check
      _
    $region27: #{tpu_custom_call.1} parent=1 // pred_check_branch
      %70 = sbr.rel (0) target = $region29
    $region28: #{tpu_custom_call.1} parent=1 // pred_region
      %72 = vsyncadd [#allocation9], 0
      %s73 = sshll.u32 %s6, 4
      %s74 = int_to_ptr.hbm [resolvable:$true] %s73
      %s75 = sshll.u32 [#allocation10], 4
      %s76 = int_to_ptr.vmem [resolvable:$true] %s75
      %81 = dma.hbm_to_vmem [thread:$0]  %s74, 2048, %s76, [#allocation9], 128, 128, 8
    $region29: #{tpu_custom_call.1} parent=1 // pred_fallthru
      _
    // Predicated region
    $region30: #{tpu_custom_call.1} parent=1 // pred_check
      _
    $region31: #{tpu_custom_call.1} parent=1 // pred_check_branch
      %83 = sbr.rel (0) target = $region33
    $region32: #{tpu_custom_call.1} parent=1 // pred_region
      _
    $region33: #{tpu_custom_call.1} parent=1 // pred_fallthru
      _
    // Predicated region
    $region34: #{tpu_custom_call.1} parent=1 // pred_check
      _
    $region35: #{tpu_custom_call.1} parent=1 // pred_check_branch
      %85 = sbr.rel (0) target = $region37
    $region36: #{tpu_custom_call.1} parent=1 // pred_region
      %87 = dma.done [#allocation3], 256
    $region37: #{tpu_custom_call.1} parent=1 // pred_fallthru
      _
    // Predicated region
    $region38: #{tpu_custom_call.1} parent=1 // pred_check
      _
    $region39: #{tpu_custom_call.1} parent=1 // pred_check_branch
      %89 = sbr.rel (0) target = $region41
    $region40: #{tpu_custom_call.1} parent=1 // pred_region
      %91 = dma.done [#allocation6], 256
    $region41: #{tpu_custom_call.1} parent=1 // pred_fallthru
      _
    // Predicated region
    $region42: #{tpu_custom_call.1} parent=1 // pred_check
      _
    $region43: #{tpu_custom_call.1} parent=1 // pred_check_branch
      %93 = sbr.rel (0) target = $region45
    $region44: #{tpu_custom_call.1} parent=1 // pred_region
      %95 = dma.done [#allocation6], 8192
    $region45: #{tpu_custom_call.1} parent=1 // pred_fallthru
      _
    // Predicated region
    $region46: #{tpu_custom_call.1} parent=1 // pred_check
      _
    $region47: #{tpu_custom_call.1} parent=1 // pred_check_branch
      %97 = sbr.rel (0) target = $region49
    $region48: #{tpu_custom_call.1} parent=1 // pred_region
      %99 = dma.done [#allocation9], 1024
    $region49: #{tpu_custom_call.1} parent=1 // pred_fallthru
      _
    // Predicated region
    $region50: #{tpu_custom_call.1} parent=1 // pred_check
      _
    $region51: #{tpu_custom_call.1} parent=1 // pred_check_branch
      %101 = sbr.rel (0) target = $region53
    $region52: #{tpu_custom_call.1} parent=1 // pred_region
      %103 = dma.done [#allocation9], 2048
    $region53: #{tpu_custom_call.1} parent=1 // pred_fallthru
      _
    %v104 = vld [vmem:[#allocation7] sm:$0xf]
    %v105 = vld [vmem:[#allocation7 + $0x4] sm:$0xf]
    %v106 = vld [vmem:[#allocation7 + $0x8] sm:$0xf]
    %v107 = vld [vmem:[#allocation7 + $0xc] sm:$0xf]
    %v108 = vld [vmem:[#allocation7 + $0x10] sm:$0xf]
    %v109 = vld [vmem:[#allocation7 + $0x14] sm:$0xf]
    %v110 = vld [vmem:[#allocation7 + $0x18] sm:$0xf]
    %v111 = vld [vmem:[#allocation7 + $0x1c] sm:$0xf]
    %v112 = vld [vmem:[#allocation7 + $0x20] sm:$0xf]
    %v113 = vld [vmem:[#allocation7 + $0x24] sm:$0xf]
    %v114 = vld [vmem:[#allocation7 + $0x28] sm:$0xf]
    %v115 = vld [vmem:[#allocation7 + $0x2c] sm:$0xf]
    %v116 = vld [vmem:[#allocation7 + $0x30] sm:$0xf]
    %v117 = vld [vmem:[#allocation7 + $0x34] sm:$0xf]
    %v118 = vld [vmem:[#allocation7 + $0x38] sm:$0xf]
    %v119 = vld [vmem:[#allocation7 + $0x3c] sm:$0xf]
    %v120 = vld [vmem:[#allocation7 + $0x40] sm:$0xf]
    %v121 = vld [vmem:[#allocation7 + $0x44] sm:$0xf]
    %v122 = vld [vmem:[#allocation7 + $0x48] sm:$0xf]
    %v123 = vld [vmem:[#allocation7 + $0x4c] sm:$0xf]
    %v124 = vld [vmem:[#allocation7 + $0x50] sm:$0xf]
    %v125 = vld [vmem:[#allocation7 + $0x54] sm:$0xf]
    %v126 = vld [vmem:[#allocation7 + $0x58] sm:$0xf]
    %v127 = vld [vmem:[#allocation7 + $0x5c] sm:$0xf]
    %v128 = vld [vmem:[#allocation7 + $0x60] sm:$0xf]
    %v129 = vld [vmem:[#allocation7 + $0x64] sm:$0xf]
    %v130 = vld [vmem:[#allocation7 + $0x68] sm:$0xf]
    %v131 = vld [vmem:[#allocation7 + $0x6c] sm:$0xf]
    %v132 = vld [vmem:[#allocation7 + $0x70] sm:$0xf]
    %v133 = vld [vmem:[#allocation7 + $0x74] sm:$0xf]
    %v134 = vld [vmem:[#allocation7 + $0x78] sm:$0xf]
    %v135 = vld [vmem:[#allocation7 + $0x7c] sm:$0xf]
    %v136 = vld [vmem:[#allocation7 + $0x80] sm:$0xf]
    %v137 = vld [vmem:[#allocation7 + $0x84] sm:$0xf]
    %v138 = vld [vmem:[#allocation7 + $0x88] sm:$0xf]
    %v139 = vld [vmem:[#allocation7 + $0x8c] sm:$0xf]
    %v140 = vld [vmem:[#allocation7 + $0x90] sm:$0xf]
    %v141 = vld [vmem:[#allocation7 + $0x94] sm:$0xf]
    %v142 = vld [vmem:[#allocation7 + $0x98] sm:$0xf]
    %v143 = vld [vmem:[#allocation7 + $0x9c] sm:$0xf]
    %v144 = vld [vmem:[#allocation7 + $0xa0] sm:$0xf]
    %v145 = vld [vmem:[#allocation7 + $0xa4] sm:$0xf]
    %v146 = vld [vmem:[#allocation7 + $0xa8] sm:$0xf]
    %v147 = vld [vmem:[#allocation7 + $0xac] sm:$0xf]
    %v148 = vld [vmem:[#allocation7 + $0xb0] sm:$0xf]
    %v149 = vld [vmem:[#allocation7 + $0xb4] sm:$0xf]
    %v150 = vld [vmem:[#allocation7 + $0xb8] sm:$0xf]
    %v151 = vld [vmem:[#allocation7 + $0xbc] sm:$0xf]
    %v152 = vld [vmem:[#allocation7 + $0xc0] sm:$0xf]
    %v153 = vld [vmem:[#allocation7 + $0xc4] sm:$0xf]
    %v154 = vld [vmem:[#allocation7 + $0xc8] sm:$0xf]
    %v155 = vld [vmem:[#allocation7 + $0xcc] sm:$0xf]
    %v156 = vld [vmem:[#allocation7 + $0xd0] sm:$0xf]
    %v157 = vld [vmem:[#allocation7 + $0xd4] sm:$0xf]
    %v158 = vld [vmem:[#allocation7 + $0xd8] sm:$0xf]
    %v159 = vld [vmem:[#allocation7 + $0xdc] sm:$0xf]
    %v160 = vld [vmem:[#allocation7 + $0xe0] sm:$0xf]
    %v161 = vld [vmem:[#allocation7 + $0xe4] sm:$0xf]
    %v162 = vld [vmem:[#allocation7 + $0xe8] sm:$0xf]
    %v163 = vld [vmem:[#allocation7 + $0xec] sm:$0xf]
    %v164 = vld [vmem:[#allocation7 + $0xf0] sm:$0xf]
    %v165 = vld [vmem:[#allocation7 + $0xf4] sm:$0xf]
    %v166 = vld [vmem:[#allocation7 + $0xf8] sm:$0xf]
    %v167 = vld [vmem:[#allocation7 + $0xfc] sm:$0xf]
    %v168 = vld [vmem:[#allocation7 + $0x100] sm:$0xf]
    %v169 = vld [vmem:[#allocation7 + $0x104] sm:$0xf]
    %v170 = vld [vmem:[#allocation7 + $0x108] sm:$0xf]
    %v171 = vld [vmem:[#allocation7 + $0x10c] sm:$0xf]
    %v172 = vld [vmem:[#allocation7 + $0x110] sm:$0xf]
    %v173 = vld [vmem:[#allocation7 + $0x114] sm:$0xf]
    %v174 = vld [vmem:[#allocation7 + $0x118] sm:$0xf]
    %v175 = vld [vmem:[#allocation7 + $0x11c] sm:$0xf]
    %v176 = vld [vmem:[#allocation7 + $0x120] sm:$0xf]
    %v177 = vld [vmem:[#allocation7 + $0x124] sm:$0xf]
    %v178 = vld [vmem:[#allocation7 + $0x128] sm:$0xf]
    %v179 = vld [vmem:[#allocation7 + $0x12c] sm:$0xf]
    %v180 = vld [vmem:[#allocation7 + $0x130] sm:$0xf]
    %v181 = vld [vmem:[#allocation7 + $0x134] sm:$0xf]
    %v182 = vld [vmem:[#allocation7 + $0x138] sm:$0xf]
    %v183 = vld [vmem:[#allocation7 + $0x13c] sm:$0xf]
    %v184 = vld [vmem:[#allocation7 + $0x140] sm:$0xf]
    %v185 = vld [vmem:[#allocation7 + $0x144] sm:$0xf]
    %v186 = vld [vmem:[#allocation7 + $0x148] sm:$0xf]
    %v187 = vld [vmem:[#allocation7 + $0x14c] sm:$0xf]
    %v188 = vld [vmem:[#allocation7 + $0x150] sm:$0xf]
    %v189 = vld [vmem:[#allocation7 + $0x154] sm:$0xf]
    %v190 = vld [vmem:[#allocation7 + $0x158] sm:$0xf]
    %v191 = vld [vmem:[#allocation7 + $0x15c] sm:$0xf]
    %v192 = vld [vmem:[#allocation7 + $0x160] sm:$0xf]
    %v193 = vld [vmem:[#allocation7 + $0x164] sm:$0xf]
    %v194 = vld [vmem:[#allocation7 + $0x168] sm:$0xf]
    %v195 = vld [vmem:[#allocation7 + $0x16c] sm:$0xf]
    %v196 = vld [vmem:[#allocation7 + $0x170] sm:$0xf]
    %v197 = vld [vmem:[#allocation7 + $0x174] sm:$0xf]
    %v198 = vld [vmem:[#allocation7 + $0x178] sm:$0xf]
    %v199 = vld [vmem:[#allocation7 + $0x17c] sm:$0xf]
    %v200 = vld [vmem:[#allocation7 + $0x180] sm:$0xf]
    %v201 = vld [vmem:[#allocation7 + $0x184] sm:$0xf]
    %v202 = vld [vmem:[#allocation7 + $0x188] sm:$0xf]
    %v203 = vld [vmem:[#allocation7 + $0x18c] sm:$0xf]
    %v204 = vld [vmem:[#allocation7 + $0x190] sm:$0xf]
    %v205 = vld [vmem:[#allocation7 + $0x194] sm:$0xf]
    %v206 = vld [vmem:[#allocation7 + $0x198] sm:$0xf]
    %v207 = vld [vmem:[#allocation7 + $0x19c] sm:$0xf]
    %v208 = vld [vmem:[#allocation7 + $0x1a0] sm:$0xf]
    %v209 = vld [vmem:[#allocation7 + $0x1a4] sm:$0xf]
    %v210 = vld [vmem:[#allocation7 + $0x1a8] sm:$0xf]
    %v211 = vld [vmem:[#allocation7 + $0x1ac] sm:$0xf]
    %v212 = vld [vmem:[#allocation7 + $0x1b0] sm:$0xf]
    %v213 = vld [vmem:[#allocation7 + $0x1b4] sm:$0xf]
    %v214 = vld [vmem:[#allocation7 + $0x1b8] sm:$0xf]
    %v215 = vld [vmem:[#allocation7 + $0x1bc] sm:$0xf]
    %v216 = vld [vmem:[#allocation7 + $0x1c0] sm:$0xf]
    %v217 = vld [vmem:[#allocation7 + $0x1c4] sm:$0xf]
    %v218 = vld [vmem:[#allocation7 + $0x1c8] sm:$0xf]
    %v219 = vld [vmem:[#allocation7 + $0x1cc] sm:$0xf]
    %v220 = vld [vmem:[#allocation7 + $0x1d0] sm:$0xf]
    %v221 = vld [vmem:[#allocation7 + $0x1d4] sm:$0xf]
    %v222 = vld [vmem:[#allocation7 + $0x1d8] sm:$0xf]
    %v223 = vld [vmem:[#allocation7 + $0x1dc] sm:$0xf]
    %v224 = vld [vmem:[#allocation7 + $0x1e0] sm:$0xf]
    %v225 = vld [vmem:[#allocation7 + $0x1e4] sm:$0xf]
    %v226 = vld [vmem:[#allocation7 + $0x1e8] sm:$0xf]
    %v227 = vld [vmem:[#allocation7 + $0x1ec] sm:$0xf]
    %v228 = vld [vmem:[#allocation7 + $0x1f0] sm:$0xf]
    %v229 = vld [vmem:[#allocation7 + $0x1f4] sm:$0xf]
    %v230 = vld [vmem:[#allocation7 + $0x1f8] sm:$0xf]
    %v231 = vld [vmem:[#allocation7 + $0x1fc] sm:$0xf]
    %v232 = vld [vmem:[#allocation2] sm:$0xff]
    %v233 = vld [vmem:[#allocation2 + $0x8] sm:$0xff]
    %236 = vst [vmem:[#allocation1] ss:$4 sm:$0xff] %v232
    %s237 = scalar_lea.vmem [#allocation1], 32
    %238 = vst [vmem:[%s237] ss:$4 sm:$0xff] %v233
    %v239 = vld.sshfl [vmem:[#allocation1] sm:$0xff pattern:$0x73625140]
    %v240 = vld.sshfl [vmem:[#allocation1 + $0x8] sm:$0xff pattern:$0x73625140]
    %v241 = vld.sshfl [vmem:[#allocation1 + $0x10] sm:$0xff pattern:$0x73625140]
    %v242 = vld.sshfl [vmem:[#allocation1 + $0x18] sm:$0xff pattern:$0x73625140]
    %v243 = vld.sshfl [vmem:[#allocation1 + $0x20] sm:$0xff pattern:$0x73625140]
    %v244 = vld.sshfl [vmem:[#allocation1 + $0x28] sm:$0xff pattern:$0x73625140]
    %v245 = vld.sshfl [vmem:[#allocation1 + $0x30] sm:$0xff pattern:$0x73625140]
    %v246 = vld.sshfl [vmem:[#allocation1 + $0x38] sm:$0xff pattern:$0x73625140]
    %v255 = vpack.c.bf16 %v239, %v239
    %v256 = vpack.c.bf16 %v240, %v240
    %v257 = vpack.c.bf16 %v241, %v241
    %v258 = vpack.c.bf16 %v242, %v242
    %v259 = vpack.c.bf16 %v243, %v243
    %v260 = vpack.c.bf16 %v244, %v244
    %v261 = vpack.c.bf16 %v245, %v245
    %v262 = vpack.c.bf16 %v246, %v246
    %v391 = vunpack.c.l.b16 %v104
    %v392 = vunpack.c.l.b16 %v105
    %v393 = vunpack.c.l.b16 %v106
    %v394 = vunpack.c.l.b16 %v107
    %v395 = vunpack.c.l.b16 %v108
    %v396 = vunpack.c.l.b16 %v109
    %v397 = vunpack.c.l.b16 %v110
    %v398 = vunpack.c.l.b16 %v111
    %v399 = vunpack.c.l.b16 %v112
    %v400 = vunpack.c.l.b16 %v113
    %v401 = vunpack.c.l.b16 %v114
    %v402 = vunpack.c.l.b16 %v115
    %v403 = vunpack.c.l.b16 %v116
    %v404 = vunpack.c.l.b16 %v117
    %v405 = vunpack.c.l.b16 %v118
    %v406 = vunpack.c.l.b16 %v119
    %v407 = vunpack.c.l.b16 %v120
    %v408 = vunpack.c.l.b16 %v121
    %v409 = vunpack.c.l.b16 %v122
    %v410 = vunpack.c.l.b16 %v123
    %v411 = vunpack.c.l.b16 %v124
    %v412 = vunpack.c.l.b16 %v125
    %v413 = vunpack.c.l.b16 %v126
    %v414 = vunpack.c.l.b16 %v127
    %v415 = vunpack.c.l.b16 %v128
    %v416 = vunpack.c.l.b16 %v129
    %v417 = vunpack.c.l.b16 %v130
    %v418 = vunpack.c.l.b16 %v131
    %v419 = vunpack.c.l.b16 %v132
    %v420 = vunpack.c.l.b16 %v133
    %v421 = vunpack.c.l.b16 %v134
    %v422 = vunpack.c.l.b16 %v135
    %v423 = vunpack.c.l.b16 %v136
    %v424 = vunpack.c.l.b16 %v137
    %v425 = vunpack.c.l.b16 %v138
    %v426 = vunpack.c.l.b16 %v139
    %v427 = vunpack.c.l.b16 %v140
    %v428 = vunpack.c.l.b16 %v141
    %v429 = vunpack.c.l.b16 %v142
    %v430 = vunpack.c.l.b16 %v143
    %v431 = vunpack.c.l.b16 %v144
    %v432 = vunpack.c.l.b16 %v145
    %v433 = vunpack.c.l.b16 %v146
    %v434 = vunpack.c.l.b16 %v147
    %v435 = vunpack.c.l.b16 %v148
    %v436 = vunpack.c.l.b16 %v149
    %v437 = vunpack.c.l.b16 %v150
    %v438 = vunpack.c.l.b16 %v151
    %v439 = vunpack.c.l.b16 %v152
    %v440 = vunpack.c.l.b16 %v153
    %v441 = vunpack.c.l.b16 %v154
    %v442 = vunpack.c.l.b16 %v155
    %v443 = vunpack.c.l.b16 %v156
    %v444 = vunpack.c.l.b16 %v157
    %v445 = vunpack.c.l.b16 %v158
    %v446 = vunpack.c.l.b16 %v159
    %v447 = vunpack.c.l.b16 %v160
    %v448 = vunpack.c.l.b16 %v161
    %v449 = vunpack.c.l.b16 %v162
    %v450 = vunpack.c.l.b16 %v163
    %v451 = vunpack.c.l.b16 %v164
    %v452 = vunpack.c.l.b16 %v165
    %v453 = vunpack.c.l.b16 %v166
    %v454 = vunpack.c.l.b16 %v167
    %v455 = vunpack.c.l.b16 %v168
    %v456 = vunpack.c.l.b16 %v169
    %v457 = vunpack.c.l.b16 %v170
    %v458 = vunpack.c.l.b16 %v171
    %v459 = vunpack.c.l.b16 %v172
    %v460 = vunpack.c.l.b16 %v173
    %v461 = vunpack.c.l.b16 %v174
    %v462 = vunpack.c.l.b16 %v175
    %v463 = vunpack.c.l.b16 %v176
    %v464 = vunpack.c.l.b16 %v177
    %v465 = vunpack.c.l.b16 %v178
    %v466 = vunpack.c.l.b16 %v179
    %v467 = vunpack.c.l.b16 %v180
    %v468 = vunpack.c.l.b16 %v181
    %v469 = vunpack.c.l.b16 %v182
    %v470 = vunpack.c.l.b16 %v183
    %v471 = vunpack.c.l.b16 %v184
    %v472 = vunpack.c.l.b16 %v185
    %v473 = vunpack.c.l.b16 %v186
    %v474 = vunpack.c.l.b16 %v187
    %v475 = vunpack.c.l.b16 %v188
    %v476 = vunpack.c.l.b16 %v189
    %v477 = vunpack.c.l.b16 %v190
    %v478 = vunpack.c.l.b16 %v191
    %v479 = vunpack.c.l.b16 %v192
    %v480 = vunpack.c.l.b16 %v193
    %v481 = vunpack.c.l.b16 %v194
    %v482 = vunpack.c.l.b16 %v195
    %v483 = vunpack.c.l.b16 %v196
    %v484 = vunpack.c.l.b16 %v197
    %v485 = vunpack.c.l.b16 %v198
    %v486 = vunpack.c.l.b16 %v199
    %v487 = vunpack.c.l.b16 %v200
    %v488 = vunpack.c.l.b16 %v201
    %v489 = vunpack.c.l.b16 %v202
    %v490 = vunpack.c.l.b16 %v203
    %v491 = vunpack.c.l.b16 %v204
    %v492 = vunpack.c.l.b16 %v205
    %v493 = vunpack.c.l.b16 %v206
    %v494 = vunpack.c.l.b16 %v207
    %v495 = vunpack.c.l.b16 %v208
    %v496 = vunpack.c.l.b16 %v209
    %v497 = vunpack.c.l.b16 %v210
    %v498 = vunpack.c.l.b16 %v211
    %v499 = vunpack.c.l.b16 %v212
    %v500 = vunpack.c.l.b16 %v213
    %v501 = vunpack.c.l.b16 %v214
    %v502 = vunpack.c.l.b16 %v215
    %v503 = vunpack.c.l.b16 %v216
    %v504 = vunpack.c.l.b16 %v217
    %v505 = vunpack.c.l.b16 %v218
    %v506 = vunpack.c.l.b16 %v219
    %v507 = vunpack.c.l.b16 %v220
    %v508 = vunpack.c.l.b16 %v221
    %v509 = vunpack.c.l.b16 %v222
    %v510 = vunpack.c.l.b16 %v223
    %v511 = vunpack.c.l.b16 %v224
    %v512 = vunpack.c.l.b16 %v225
    %v513 = vunpack.c.l.b16 %v226
    %v514 = vunpack.c.l.b16 %v227
    %v515 = vunpack.c.l.b16 %v228
    %v516 = vunpack.c.l.b16 %v229
    %v517 = vunpack.c.l.b16 %v230
    %v518 = vunpack.c.l.b16 %v231
    %v519 = vpack.c.b16 %v392, %v391
    %v520 = vpack.c.b16 %v394, %v393
    %v521 = vpack.c.b16 %v396, %v395
    %v522 = vpack.c.b16 %v398, %v397
    %v523 = vpack.c.b16 %v400, %v399
    %v524 = vpack.c.b16 %v402, %v401
    %v525 = vpack.c.b16 %v404, %v403
    %v526 = vpack.c.b16 %v406, %v405
    %v527 = vpack.c.b16 %v408, %v407
    %v528 = vpack.c.b16 %v410, %v409
    %v529 = vpack.c.b16 %v412, %v411
    %v530 = vpack.c.b16 %v414, %v413
    %v531 = vpack.c.b16 %v416, %v415
    %v532 = vpack.c.b16 %v418, %v417
    %v533 = vpack.c.b16 %v420, %v419
    %v534 = vpack.c.b16 %v422, %v421
    %v535 = vpack.c.b16 %v424, %v423
    %v536 = vpack.c.b16 %v426, %v425
    %v537 = vpack.c.b16 %v428, %v427
    %v538 = vpack.c.b16 %v430, %v429
    %v539 = vpack.c.b16 %v432, %v431
    %v540 = vpack.c.b16 %v434, %v433
    %v541 = vpack.c.b16 %v436, %v435
    %v542 = vpack.c.b16 %v438, %v437
    %v543 = vpack.c.b16 %v440, %v439
    %v544 = vpack.c.b16 %v442, %v441
    %v545 = vpack.c.b16 %v444, %v443
    %v546 = vpack.c.b16 %v446, %v445
    %v547 = vpack.c.b16 %v448, %v447
    %v548 = vpack.c.b16 %v450, %v449
    %v549 = vpack.c.b16 %v452, %v451
    %v550 = vpack.c.b16 %v454, %v453
    %v551 = vpack.c.b16 %v456, %v455
    %v552 = vpack.c.b16 %v458, %v457
    %v553 = vpack.c.b16 %v460, %v459
    %v554 = vpack.c.b16 %v462, %v461
    %v555 = vpack.c.b16 %v464, %v463
    %v556 = vpack.c.b16 %v466, %v465
    %v557 = vpack.c.b16 %v468, %v467
    %v558 = vpack.c.b16 %v470, %v469
    %v559 = vpack.c.b16 %v472, %v471
    %v560 = vpack.c.b16 %v474, %v473
    %v561 = vpack.c.b16 %v476, %v475
    %v562 = vpack.c.b16 %v478, %v477
    %v563 = vpack.c.b16 %v480, %v479
    %v564 = vpack.c.b16 %v482, %v481
    %v565 = vpack.c.b16 %v484, %v483
    %v566 = vpack.c.b16 %v486, %v485
    %v567 = vpack.c.b16 %v488, %v487
    %v568 = vpack.c.b16 %v490, %v489
    %v569 = vpack.c.b16 %v492, %v491
    %v570 = vpack.c.b16 %v494, %v493
    %v571 = vpack.c.b16 %v496, %v495
    %v572 = vpack.c.b16 %v498, %v497
    %v573 = vpack.c.b16 %v500, %v499
    %v574 = vpack.c.b16 %v502, %v501
    %v575 = vpack.c.b16 %v504, %v503
    %v576 = vpack.c.b16 %v506, %v505
    %v577 = vpack.c.b16 %v508, %v507
    %v578 = vpack.c.b16 %v510, %v509
    %v579 = vpack.c.b16 %v512, %v511
    %v580 = vpack.c.b16 %v514, %v513
    %v581 = vpack.c.b16 %v516, %v515
    %v582 = vpack.c.b16 %v518, %v517
    %647 = vmatpush.bf16.msra.mxu0 %v526
    %648 = vmatpush.bf16.msra.mxu0 %v525
    %649 = vmatpush.bf16.msra.mxu0 %v524
    %650 = vmatpush.bf16.msra.mxu0 %v523
    %651 = vmatpush.bf16.msra.mxu0 %v522
    %652 = vmatpush.bf16.msra.mxu0 %v521
    %653 = vmatpush.bf16.msra.mxu0 %v520
    %654 = vmatpush.bf16.msra.mxu0 %v519
    %655 = vmatmul.bf16.gmra.mxu0 %v255
    %v656 = vpop.f32.mrf.mxu0
    %v657 = vadd.f32 0.0, %v656
    %v658 = vpop.f32.mrf.mxu0
    %659 = vdwg.mxu0
    %660 = vmatpush.bf16.msra.mxu0 %v534
    %661 = vmatpush.bf16.msra.mxu0 %v533
    %662 = vmatpush.bf16.msra.mxu0 %v532
    %663 = vmatpush.bf16.msra.mxu0 %v531
    %664 = vmatpush.bf16.msra.mxu0 %v530
    %665 = vmatpush.bf16.msra.mxu0 %v529
    %666 = vmatpush.bf16.msra.mxu0 %v528
    %667 = vmatpush.bf16.msra.mxu0 %v527
    %668 = vmatmul.bf16.gmra.mxu0 %v256
    %v669 = vpop.f32.mrf.mxu0
    %v670 = vadd.f32 %v657, %v669
    %v671 = vpop.f32.mrf.mxu0
    %672 = vdwg.mxu0
    %673 = vmatpush.bf16.msra.mxu0 %v542
    %674 = vmatpush.bf16.msra.mxu0 %v541
    %675 = vmatpush.bf16.msra.mxu0 %v540
    %676 = vmatpush.bf16.msra.mxu0 %v539
    %677 = vmatpush.bf16.msra.mxu0 %v538
    %678 = vmatpush.bf16.msra.mxu0 %v537
    %679 = vmatpush.bf16.msra.mxu0 %v536
    %680 = vmatpush.bf16.msra.mxu0 %v535
    %681 = vmatmul.bf16.gmra.mxu0 %v257
    %v682 = vpop.f32.mrf.mxu0
    %v683 = vadd.f32 %v670, %v682
    %v684 = vpop.f32.mrf.mxu0
    %685 = vdwg.mxu0
    %686 = vmatpush.bf16.msra.mxu0 %v550
    %687 = vmatpush.bf16.msra.mxu0 %v549
    %688 = vmatpush.bf16.msra.mxu0 %v548
    %689 = vmatpush.bf16.msra.mxu0 %v547
    %690 = vmatpush.bf16.msra.mxu0 %v546
    %691 = vmatpush.bf16.msra.mxu0 %v545
    %692 = vmatpush.bf16.msra.mxu0 %v544
    %693 = vmatpush.bf16.msra.mxu0 %v543
    %694 = vmatmul.bf16.gmra.mxu0 %v258
    %v695 = vpop.f32.mrf.mxu0
    %v696 = vadd.f32 %v683, %v695
    %v697 = vpop.f32.mrf.mxu0
    %698 = vdwg.mxu0
    %699 = vmatpush.bf16.msra.mxu0 %v558
    %700 = vmatpush.bf16.msra.mxu0 %v557
    %701 = vmatpush.bf16.msra.mxu0 %v556
    %702 = vmatpush.bf16.msra.mxu0 %v555
    %703 = vmatpush.bf16.msra.mxu0 %v554
    %704 = vmatpush.bf16.msra.mxu0 %v553
    %705 = vmatpush.bf16.msra.mxu0 %v552
    %706 = vmatpush.bf16.msra.mxu0 %v551
    %707 = vmatmul.bf16.gmra.mxu0 %v259
    %v708 = vpop.f32.mrf.mxu0
    %v709 = vadd.f32 %v696, %v708
    %v710 = vpop.f32.mrf.mxu0
    %711 = vdwg.mxu0
    %712 = vmatpush.bf16.msra.mxu0 %v566
    %713 = vmatpush.bf16.msra.mxu0 %v565
    %714 = vmatpush.bf16.msra.mxu0 %v564
    %715 = vmatpush.bf16.msra.mxu0 %v563
    %716 = vmatpush.bf16.msra.mxu0 %v562
    %717 = vmatpush.bf16.msra.mxu0 %v561
    %718 = vmatpush.bf16.msra.mxu0 %v560
    %719 = vmatpush.bf16.msra.mxu0 %v559
    %720 = vmatmul.bf16.gmra.mxu0 %v260
    %v721 = vpop.f32.mrf.mxu0
    %v722 = vadd.f32 %v709, %v721
    %v723 = vpop.f32.mrf.mxu0
    %724 = vdwg.mxu0
    %725 = vmatpush.bf16.msra.mxu0 %v574
    %726 = vmatpush.bf16.msra.mxu0 %v573
    %727 = vmatpush.bf16.msra.mxu0 %v572
    %728 = vmatpush.bf16.msra.mxu0 %v571
    %729 = vmatpush.bf16.msra.mxu0 %v570
    %730 = vmatpush.bf16.msra.mxu0 %v569
    %731 = vmatpush.bf16.msra.mxu0 %v568
    %732 = vmatpush.bf16.msra.mxu0 %v567
    %733 = vmatmul.bf16.gmra.mxu0 %v261
    %v734 = vpop.f32.mrf.mxu0
    %v735 = vadd.f32 %v722, %v734
    %v736 = vpop.f32.mrf.mxu0
    %737 = vdwg.mxu0
    %738 = vmatpush.bf16.msra.mxu0 %v582
    %739 = vmatpush.bf16.msra.mxu0 %v581
    %740 = vmatpush.bf16.msra.mxu0 %v580
    %741 = vmatpush.bf16.msra.mxu0 %v579
    %742 = vmatpush.bf16.msra.mxu0 %v578
    %743 = vmatpush.bf16.msra.mxu0 %v577
    %744 = vmatpush.bf16.msra.mxu0 %v576
    %745 = vmatpush.bf16.msra.mxu0 %v575
    %746 = vmatmul.bf16.gmra.mxu0 %v262
    %v747 = vpop.f32.mrf.mxu0
    %v748 = vadd.f32 %v735, %v747
    %v749 = vpop.f32.mrf.mxu0
    %750 = vdwg.mxu0
    %v751 = vld [vmem:[#allocation5] sm:$0xff]
    %v752 = vld [vmem:[#allocation5 + $0x8] sm:$0xff]
    %755 = vst [vmem:[#allocation1] ss:$4 sm:$0xff] %v751
    %s756 = scalar_lea.vmem [#allocation1], 32
    %757 = vst [vmem:[%s756] ss:$4 sm:$0xff] %v752
    %v758 = vld.sshfl [vmem:[#allocation1] sm:$0xff pattern:$0x73625140]
    %v759 = vld.sshfl [vmem:[#allocation1 + $0x8] sm:$0xff pattern:$0x73625140]
    %v760 = vld.sshfl [vmem:[#allocation1 + $0x10] sm:$0xff pattern:$0x73625140]
    %v761 = vld.sshfl [vmem:[#allocation1 + $0x18] sm:$0xff pattern:$0x73625140]
    %v762 = vld.sshfl [vmem:[#allocation1 + $0x20] sm:$0xff pattern:$0x73625140]
    %v763 = vld.sshfl [vmem:[#allocation1 + $0x28] sm:$0xff pattern:$0x73625140]
    %v764 = vld.sshfl [vmem:[#allocation1 + $0x30] sm:$0xff pattern:$0x73625140]
    %v765 = vld.sshfl [vmem:[#allocation1 + $0x38] sm:$0xff pattern:$0x73625140]
    %v774 = vpack.c.bf16 %v758, %v758
    %v775 = vpack.c.bf16 %v759, %v759
    %v776 = vpack.c.bf16 %v760, %v760
    %v777 = vpack.c.bf16 %v761, %v761
    %v778 = vpack.c.bf16 %v762, %v762
    %v779 = vpack.c.bf16 %v763, %v763
    %v780 = vpack.c.bf16 %v764, %v764
    %v781 = vpack.c.bf16 %v765, %v765
    %782 = vmatpush.bf16.msra.mxu0 %v526
    %783 = vmatpush.bf16.msra.mxu0 %v525
    %784 = vmatpush.bf16.msra.mxu0 %v524
    %785 = vmatpush.bf16.msra.mxu0 %v523
    %786 = vmatpush.bf16.msra.mxu0 %v522
    %787 = vmatpush.bf16.msra.mxu0 %v521
    %788 = vmatpush.bf16.msra.mxu0 %v520
    %789 = vmatpush.bf16.msra.mxu0 %v519
    %790 = vmatmul.bf16.gmra.mxu0 %v774
    %v791 = vpop.f32.mrf.mxu0
    %v792 = vadd.f32 0.0, %v791
    %v793 = vpop.f32.mrf.mxu0
    %794 = vdwg.mxu0
    %795 = vmatpush.bf16.msra.mxu0 %v534
    %796 = vmatpush.bf16.msra.mxu0 %v533
    %797 = vmatpush.bf16.msra.mxu0 %v532
    %798 = vmatpush.bf16.msra.mxu0 %v531
    %799 = vmatpush.bf16.msra.mxu0 %v530
    %800 = vmatpush.bf16.msra.mxu0 %v529
    %801 = vmatpush.bf16.msra.mxu0 %v528
    %802 = vmatpush.bf16.msra.mxu0 %v527
    %803 = vmatmul.bf16.gmra.mxu0 %v775
    %v804 = vpop.f32.mrf.mxu0
    %v805 = vadd.f32 %v792, %v804
    %v806 = vpop.f32.mrf.mxu0
    %807 = vdwg.mxu0
    %808 = vmatpush.bf16.msra.mxu0 %v542
    %809 = vmatpush.bf16.msra.mxu0 %v541
    %810 = vmatpush.bf16.msra.mxu0 %v540
    %811 = vmatpush.bf16.msra.mxu0 %v539
    %812 = vmatpush.bf16.msra.mxu0 %v538
    %813 = vmatpush.bf16.msra.mxu0 %v537
    %814 = vmatpush.bf16.msra.mxu0 %v536
    %815 = vmatpush.bf16.msra.mxu0 %v535
    %816 = vmatmul.bf16.gmra.mxu0 %v776
    %v817 = vpop.f32.mrf.mxu0
    %v818 = vadd.f32 %v805, %v817
    %v819 = vpop.f32.mrf.mxu0
    %820 = vdwg.mxu0
    %821 = vmatpush.bf16.msra.mxu0 %v550
    %822 = vmatpush.bf16.msra.mxu0 %v549
    %823 = vmatpush.bf16.msra.mxu0 %v548
    %824 = vmatpush.bf16.msra.mxu0 %v547
    %825 = vmatpush.bf16.msra.mxu0 %v546
    %826 = vmatpush.bf16.msra.mxu0 %v545
    %827 = vmatpush.bf16.msra.mxu0 %v544
    %828 = vmatpush.bf16.msra.mxu0 %v543
    %829 = vmatmul.bf16.gmra.mxu0 %v777
    %v830 = vpop.f32.mrf.mxu0
    %v831 = vadd.f32 %v818, %v830
    %v832 = vpop.f32.mrf.mxu0
    %833 = vdwg.mxu0
    %834 = vmatpush.bf16.msra.mxu0 %v558
    %835 = vmatpush.bf16.msra.mxu0 %v557
    %836 = vmatpush.bf16.msra.mxu0 %v556
    %837 = vmatpush.bf16.msra.mxu0 %v555
    %838 = vmatpush.bf16.msra.mxu0 %v554
    %839 = vmatpush.bf16.msra.mxu0 %v553
    %840 = vmatpush.bf16.msra.mxu0 %v552
    %841 = vmatpush.bf16.msra.mxu0 %v551
    %842 = vmatmul.bf16.gmra.mxu0 %v778
    %v843 = vpop.f32.mrf.mxu0
    %v844 = vadd.f32 %v831, %v843
    %v845 = vpop.f32.mrf.mxu0
    %846 = vdwg.mxu0
    %847 = vmatpush.bf16.msra.mxu0 %v566
    %848 = vmatpush.bf16.msra.mxu0 %v565
    %849 = vmatpush.bf16.msra.mxu0 %v564
    %850 = vmatpush.bf16.msra.mxu0 %v563
    %851 = vmatpush.bf16.msra.mxu0 %v562
    %852 = vmatpush.bf16.msra.mxu0 %v561
    %853 = vmatpush.bf16.msra.mxu0 %v560
    %854 = vmatpush.bf16.msra.mxu0 %v559
    %855 = vmatmul.bf16.gmra.mxu0 %v779
    %v856 = vpop.f32.mrf.mxu0
    %v857 = vadd.f32 %v844, %v856
    %v858 = vpop.f32.mrf.mxu0
    %859 = vdwg.mxu0
    %860 = vmatpush.bf16.msra.mxu0 %v574
    %861 = vmatpush.bf16.msra.mxu0 %v573
    %862 = vmatpush.bf16.msra.mxu0 %v572
    %863 = vmatpush.bf16.msra.mxu0 %v571
    %864 = vmatpush.bf16.msra.mxu0 %v570
    %865 = vmatpush.bf16.msra.mxu0 %v569
    %866 = vmatpush.bf16.msra.mxu0 %v568
    %867 = vmatpush.bf16.msra.mxu0 %v567
    %868 = vmatmul.bf16.gmra.mxu0 %v780
    %v869 = vpop.f32.mrf.mxu0
    %v870 = vadd.f32 %v857, %v869
    %v871 = vpop.f32.mrf.mxu0
    %872 = vdwg.mxu0
    %873 = vmatpush.bf16.msra.mxu0 %v582
    %874 = vmatpush.bf16.msra.mxu0 %v581
    %875 = vmatpush.bf16.msra.mxu0 %v580
    %876 = vmatpush.bf16.msra.mxu0 %v579
    %877 = vmatpush.bf16.msra.mxu0 %v578
    %878 = vmatpush.bf16.msra.mxu0 %v577
    %879 = vmatpush.bf16.msra.mxu0 %v576
    %880 = vmatpush.bf16.msra.mxu0 %v575
    %881 = vmatmul.bf16.gmra.mxu0 %v781
    %v882 = vpop.f32.mrf.mxu0
    %v883 = vadd.f32 %v870, %v882
    %v884 = vpop.f32.mrf.mxu0
    %885 = vdwg.mxu0
    %v886 = vmax.f32 %v748, %v883
    %v887 = vld [vmem:[%s3] sm:$0x1]
    %v889 = vperm.slane %v887, 0
    %v891 = vadd.f32 %v886, %v889
    %v892 = vmax.f32 %v891, 0.0
    %v893 = vpack.c.bf16 %v892, %v892
    %v894 = vld [vmem:[#allocation8] sm:$0xf]
    %v895 = vld [vmem:[#allocation8 + $0x4] sm:$0xf]
    %v896 = vld [vmem:[#allocation8 + $0x8] sm:$0xf]
    %v897 = vld [vmem:[#allocation8 + $0xc] sm:$0xf]
    %v898 = vld [vmem:[#allocation8 + $0x10] sm:$0xf]
    %v899 = vld [vmem:[#allocation8 + $0x14] sm:$0xf]
    %v900 = vld [vmem:[#allocation8 + $0x18] sm:$0xf]
    %v901 = vld [vmem:[#allocation8 + $0x1c] sm:$0xf]
    %v902 = vld [vmem:[#allocation8 + $0x20] sm:$0xf]
    %v903 = vld [vmem:[#allocation8 + $0x24] sm:$0xf]
    %v904 = vld [vmem:[#allocation8 + $0x28] sm:$0xf]
    %v905 = vld [vmem:[#allocation8 + $0x2c] sm:$0xf]
    %v906 = vld [vmem:[#allocation8 + $0x30] sm:$0xf]
    %v907 = vld [vmem:[#allocation8 + $0x34] sm:$0xf]
    %v908 = vld [vmem:[#allocation8 + $0x38] sm:$0xf]
    %v909 = vld [vmem:[#allocation8 + $0x3c] sm:$0xf]
    %v910 = vld [vmem:[%s5] sm:$0x1]
    %v912 = vperm.slane %v910, 0
    %v930 = vunpack.c.l.b16 %v894
    %v931 = vunpack.c.l.b16 %v895
    %v932 = vunpack.c.l.b16 %v896
    %v933 = vunpack.c.l.b16 %v897
    %v934 = vunpack.c.l.b16 %v898
    %v935 = vunpack.c.l.b16 %v899
    %v936 = vunpack.c.l.b16 %v900
    %v937 = vunpack.c.l.b16 %v901
    %v938 = vunpack.c.l.b16 %v902
    %v939 = vunpack.c.l.b16 %v903
    %v940 = vunpack.c.l.b16 %v904
    %v941 = vunpack.c.l.b16 %v905
    %v942 = vunpack.c.l.b16 %v906
    %v943 = vunpack.c.l.b16 %v907
    %v944 = vunpack.c.l.b16 %v908
    %v945 = vunpack.c.l.b16 %v909
    %v946 = vpack.c.b16 %v931, %v930
    %v947 = vpack.c.b16 %v933, %v932
    %v948 = vpack.c.b16 %v935, %v934
    %v949 = vpack.c.b16 %v937, %v936
    %v950 = vpack.c.b16 %v939, %v938
    %v951 = vpack.c.b16 %v941, %v940
    %v952 = vpack.c.b16 %v943, %v942
    %v953 = vpack.c.b16 %v945, %v944
    %962 = vmatpush.bf16.msra.mxu0 %v953
    %963 = vmatpush.bf16.msra.mxu0 %v952
    %964 = vmatpush.bf16.msra.mxu0 %v951
    %965 = vmatpush.bf16.msra.mxu0 %v950
    %966 = vmatpush.bf16.msra.mxu0 %v949
    %967 = vmatpush.bf16.msra.mxu0 %v948
    %968 = vmatpush.bf16.msra.mxu0 %v947
    %969 = vmatpush.bf16.msra.mxu0 %v946
    %970 = vmatmul.bf16.gmra.mxu0 %v893
    %v971 = vpop.f32.mrf.mxu0
    %v972 = vadd.f32 %v912, %v971
    %v973 = vpop.f32.mrf.mxu0
    %974 = vdwg.mxu0
    %v975 = vmax.f32 %v972, 0.0
    %v976 = vld [vmem:[#allocation10] sm:$0xff]
    %v977 = vld [vmem:[#allocation10 + $0x8] sm:$0xff]
    %v978 = vld [vmem:[#allocation10 + $0x10] sm:$0xff]
    %v979 = vld [vmem:[#allocation10 + $0x18] sm:$0xff]
    %v980 = vld [vmem:[#allocation10 + $0x20] sm:$0xff]
    %v981 = vld [vmem:[#allocation10 + $0x28] sm:$0xff]
    %v982 = vld [vmem:[#allocation10 + $0x30] sm:$0xff]
    %v983 = vld [vmem:[#allocation10 + $0x38] sm:$0xff]
    %v984 = vld [vmem:[#allocation10 + $0x40] sm:$0xff]
    %v985 = vld [vmem:[#allocation10 + $0x48] sm:$0xff]
    %v986 = vld [vmem:[#allocation10 + $0x50] sm:$0xff]
    %v987 = vld [vmem:[#allocation10 + $0x58] sm:$0xff]
    %v988 = vld [vmem:[#allocation10 + $0x60] sm:$0xff]
    %v989 = vld [vmem:[#allocation10 + $0x68] sm:$0xff]
    %v990 = vld [vmem:[#allocation10 + $0x70] sm:$0xff]
    %v991 = vld [vmem:[#allocation10 + $0x78] sm:$0xff]
    %v992 = vld [vmem:[%s7] sm:$0x1]
    %v994 = vperm.slane %v992, 0
    %996 = vmatpush.msra.mxu0 %v991
    %997 = vmatpush.msra.mxu0 %v990
    %998 = vmatpush.msra.mxu0 %v989
    %999 = vmatpush.msra.mxu0 %v988
    %1000 = vmatpush.msra.mxu0 %v987
    %1001 = vmatpush.msra.mxu0 %v986
    %1002 = vmatpush.msra.mxu0 %v985
    %1003 = vmatpush.msra.mxu0 %v984
    %1004 = vmatpush.msra.mxu0 %v983
    %1005 = vmatpush.msra.mxu0 %v982
    %1006 = vmatpush.msra.mxu0 %v981
    %1007 = vmatpush.msra.mxu0 %v980
    %1008 = vmatpush.msra.mxu0 %v979
    %1009 = vmatpush.msra.mxu0 %v978
    %1010 = vmatpush.msra.mxu0 %v977
    %1011 = vmatpush.msra.mxu0 %v976
    %1012 = vmatmul.f32.gmra.mxu0 %v975
    %v1013 = vpop.f32.mrf.mxu0
    %v1014 = vadd.f32 %v994, %v1013
    %1015 = vdwg.mxu0
    %1016 = vst [vmem:[#allocation11] sm:$0x3] %v1014
    // Predicated region
    $region54: #{tpu_custom_call.1} parent=1 // pred_check
      _
    $region55: #{tpu_custom_call.1} parent=1 // pred_check_branch
      %1018 = sbr.rel (0) target = $region57
    $region56: #{tpu_custom_call.1} parent=1 // pred_region
      %1020 = vsyncadd [#allocation4], 0
      %s1022 = sshll.u32 [#allocation11], 4
      %s1023 = int_to_ptr.vmem [resolvable:$true] %s1022
      %s1024 = sshll.u32 %s8, 4
      %s1025 = int_to_ptr.hbm [resolvable:$true] %s1024
      %1027 = dma.vmem_to_hbm [thread:$0]  %s1023, 32, %s1025, [#allocation4]
    $region57: #{tpu_custom_call.1} parent=1 // pred_fallthru
      _
    // Predicated region
    $region58: #{tpu_custom_call.1} parent=1 // pred_check
      _
    $region59: #{tpu_custom_call.1} parent=1 // pred_check_branch
      %1029 = sbr.rel (0) target = $region61
    $region60: #{tpu_custom_call.1} parent=1 // pred_region
      %1031 = dma.done [#allocation4], 32
    $region61: #{tpu_custom_call.1} parent=1 // pred_fallthru
      _
    %1032 = vsyncpa [#allocation3], 1
    %1033 = vsyncpa [#allocation6], 1
    %1034 = vsyncpa [#allocation9], 1
    %1035 = vsyncpa [#allocation4], 1

</llo_original>
